<compile_context>
chip_gen: v7x
topology: tpu7x:2x2x1
jax: 0.10.0
libtpu: 0.0.40
codegen_flags: <defaults>
</compile_context>

<pallas_src>
import functools

import jax
import jax.numpy as jnp
from jax.experimental import pallas as pl
from jax.experimental.pallas import tpu as pltpu


def _decoder_gru_kernel(x_ref, wih_ref, whh_ref, bcomb_ref, bhn_ref, h0_ref,
                        wd_ref, bd_ref, y_ref, hT_ref, hs_ref, *, T, Bp, Hp):
    # Hoisted input projection for all timesteps at once: (T*Bp, 3Hp).
    # bcomb already contains b_ih plus the r/z parts of b_hh.
    gi = jnp.dot(x_ref[...], wih_ref[...],
                 preferred_element_type=jnp.float32) + bcomb_ref[...]

    whh = whh_ref[...]          # (Hp, 3Hp)
    bhn = bhn_ref[...]          # (1, Hp)
    h = h0_ref[...]             # (Bp, Hp) initial hidden state (encoder_states)

    for t in range(T):          # fully unrolled; all indices are static
        gh = jnp.dot(h, whh, preferred_element_type=jnp.float32)    # (Bp, 3Hp)
        gi_t = gi[t * Bp:(t + 1) * Bp, :]
        # r and z share one fused sigmoid over the first 2*Hp lanes.
        rz = jax.nn.sigmoid(gi_t[:, 0:2 * Hp] + gh[:, 0:2 * Hp])
        r = rz[:, 0:Hp]
        z = rz[:, Hp:2 * Hp]
        n = jnp.tanh(gi_t[:, 2 * Hp:3 * Hp] + r * (gh[:, 2 * Hp:3 * Hp] + bhn))
        h = (1.0 - z) * n + z * h
        # Static, sublane-aligned store of this step's hidden state.
        hs_ref[t * Bp:(t + 1) * Bp, :] = h

    hT_ref[...] = h

    # Dense head over all timesteps in one GEMM: (T*Bp, Hp) @ (Hp, Op) + b.
    y_ref[...] = jnp.dot(hs_ref[...], wd_ref[...],
                         preferred_element_type=jnp.float32) + bd_ref[...]


def decoder_gru_forward(decoder_inputs, encoder_states,
                        w_ih, w_hh, b_ih, b_hh, w_dense, b_dense):
    """Forward pass of DecoderModel_GRU.

    decoder_inputs : (B, T, I)  batch_first, I = num_decoder_tokens
    encoder_states : (1, B, H)  initial hidden state, H = latent_dim
    w_ih (3H, I), w_hh (3H, H), b_ih (3H,), b_hh (3H,)   nn.GRU parameters
    w_dense (I, H), b_dense (I,)                          nn.Linear parameters
    Returns (final_outputs (B, T, I), state (1, B, H)), fp32.
    """
    f32 = jnp.float32
    B, T, I = decoder_inputs.shape
    H = w_hh.shape[1]
    O = w_dense.shape[0]

    Bp = ((B + 7) // 8) * 8            # sublane-pad batch
    Hp = ((H + 127) // 128) * 128      # lane-pad hidden
    Op = ((O + 127) // 128) * 128      # lane-pad dense output features

    # --- inputs: time-major, batch-padded, flattened to (T*Bp, I) -----------
    x_tm = jnp.transpose(decoder_inputs, (1, 0, 2)).astype(f32)      # (T, B, I)
    x_tm = jnp.pad(x_tm, ((0, 0), (0, Bp - B), (0, 0)))              # (T, Bp, I)
    x_flat = x_tm.reshape(T * Bp, I)

    # --- weights: transpose + per-gate lane padding (gate order r|z|n) ------
    def pad_gate_cols(w_t):   # (rows, 3H) -> (rows, 3Hp)
        parts = [jnp.pad(w_t[:, k * H:(k + 1) * H], ((0, 0), (0, Hp - H)))
                 for k in range(3)]
        return jnp.concatenate(parts, axis=1)

    wih_t = pad_gate_cols(jnp.transpose(w_ih).astype(f32))           # (I, 3Hp)
    whh_t = pad_gate_cols(jnp.transpose(w_hh).astype(f32))           # (H, 3Hp)
    whh_t = jnp.pad(whh_t, ((0, Hp - H), (0, 0)))                    # (Hp, 3Hp)

    def pad_row(v, n_to):   # (n,) -> (1, n_to)
        return jnp.pad(v.astype(f32), (0, n_to - v.shape[0])).reshape(1, n_to)

    b_ih = b_ih.astype(f32)
    b_hh = b_hh.astype(f32)
    # Fold b_ih entirely, plus the r/z parts of b_hh; keep b_hn separate since
    # the n gate needs r * (W_hn h + b_hn).
    b_comb = jnp.concatenate(
        [pad_row(b_ih[0:H] + b_hh[0:H], Hp),
         pad_row(b_ih[H:2 * H] + b_hh[H:2 * H], Hp),
         pad_row(b_ih[2 * H:3 * H], Hp)], axis=1)                    # (1, 3Hp)
    b_hn = pad_row(b_hh[2 * H:3 * H], Hp)                            # (1, Hp)

    h0 = jnp.pad(encoder_states[0].astype(f32),
                 ((0, Bp - B), (0, Hp - H)))                         # (Bp, Hp)

    wd_t = jnp.pad(jnp.transpose(w_dense).astype(f32),
                   ((0, Hp - H), (0, Op - O)))                       # (Hp, Op)
    bd = pad_row(b_dense, Op)                                        # (1, Op)

    # --- single pallas_call, whole problem resident in VMEM -----------------
    flops = (2 * (T * Bp) * I * (3 * Hp)           # hoisted input projection
             + T * 2 * Bp * Hp * (3 * Hp)          # recurrent projections
             + 2 * (T * Bp) * Hp * Op)             # dense head
    transcendentals = T * Bp * 3 * Hp
    bytes_accessed = 4 * (x_flat.size + wih_t.size + whh_t.size + b_comb.size
                          + b_hn.size + h0.size + wd_t.size + bd.size
                          + T * Bp * Op + Bp * Hp)

    vmem_spec = pl.BlockSpec(memory_space=pltpu.MemorySpace.VMEM)

    y_flat, h_last = pl.pallas_call(
        functools.partial(_decoder_gru_kernel, T=T, Bp=Bp, Hp=Hp),
        out_shape=(jax.ShapeDtypeStruct((T * Bp, Op), f32),
                   jax.ShapeDtypeStruct((Bp, Hp), f32)),
        in_specs=[vmem_spec] * 8,
        out_specs=(vmem_spec, vmem_spec),
        scratch_shapes=[pltpu.VMEM((T * Bp, Hp), f32)],
        cost_estimate=pl.CostEstimate(flops=int(flops),
                                      transcendentals=int(transcendentals),
                                      bytes_accessed=int(bytes_accessed)),
    )(x_flat, wih_t, whh_t, b_comb, b_hn, h0, wd_t, bd)

    final_outputs = jnp.transpose(y_flat.reshape(T, Bp, Op)[:, :B, :O],
                                  (1, 0, 2))                          # (B, T, O)
    state = h_last[:B, :H][None]                                      # (1, B, H)
    return final_outputs, state


def _reference(decoder_inputs, encoder_states, w_ih, w_hh, b_ih, b_hh,
               w_dense, b_dense):
    """Pure-JAX reference matching torch.nn.GRU (+ Linear) semantics."""
    x_tm = jnp.transpose(decoder_inputs, (1, 0, 2)).astype(jnp.float32)  # (T,B,I)
    h0 = encoder_states[0].astype(jnp.float32)                           # (B,H)

    def step(h, x_t):
        gi = x_t @ w_ih.T + b_ih
        gh = h @ w_hh.T + b_hh
        i_r, i_z, i_n = jnp.split(gi, 3, axis=-1)
        h_r, h_z, h_n = jnp.split(gh, 3, axis=-1)
        r = jax.nn.sigmoid(i_r + h_r)
        z = jax.nn.sigmoid(i_z + h_z)
        n = jnp.tanh(i_n + r * h_n)
        h_new = (1.0 - z) * n + z * h
        return h_new, h_new

    h_final, hs = jax.lax.scan(step, h0, x_tm)          # hs: (T, B, H)
    outs = jnp.transpose(hs, (1, 0, 2)) @ w_dense.T + b_dense   # (B, T, O)
    return outs, h_final[None]


if __name__ == "__main__":
    NUM_DECODER_TOKENS = 16   # config.num_decoder_tokens
    LATENT_DIM = 32           # config.latent_dim
    B, T = 2, 8

    key = jax.random.PRNGKey(0)
    k_x, k_h0, k_wih, k_whh, k_bih, k_bhh, k_wd, k_bd = jax.random.split(key, 8)

    # Deterministic parameter init (uniform(-1/sqrt(H), 1/sqrt(H)), like PyTorch)
    bound = 1.0 / jnp.sqrt(jnp.float32(LATENT_DIM))
    w_ih = jax.random.uniform(k_wih, (3 * LATENT_DIM, NUM_DECODER_TOKENS),
                              jnp.float32, -bound, bound)
    w_hh = jax.random.uniform(k_whh, (3 * LATENT_DIM, LATENT_DIM),
                              jnp.float32, -bound, bound)
    b_ih = jax.random.uniform(k_bih, (3 * LATENT_DIM,), jnp.float32, -bound, bound)
    b_hh = jax.random.uniform(k_bhh, (3 * LATENT_DIM,), jnp.float32, -bound, bound)
    w_dense = jax.random.uniform(k_wd, (NUM_DECODER_TOKENS, LATENT_DIM),
                                 jnp.float32, -bound, bound)
    b_dense = jax.random.uniform(k_bd, (NUM_DECODER_TOKENS,), jnp.float32,
                                 -bound, bound)

    decoder_inputs = jax.random.normal(k_x, (B, T, NUM_DECODER_TOKENS), jnp.float32)
    encoder_states = jax.random.normal(k_h0, (1, B, LATENT_DIM), jnp.float32)

    final_outputs, state = decoder_gru_forward(
        decoder_inputs, encoder_states, w_ih, w_hh, b_ih, b_hh, w_dense, b_dense)
    final_outputs, state = jax.block_until_ready((final_outputs, state))

    ref_out, ref_state = _reference(
        decoder_inputs, encoder_states, w_ih, w_hh, b_ih, b_hh, w_dense, b_dense)

    assert final_outputs.shape == (B, T, NUM_DECODER_TOKENS)
    assert state.shape == (1, B, LATENT_DIM)
    assert jnp.allclose(final_outputs, ref_out, atol=1e-4, rtol=1e-4)
    assert jnp.allclose(state, ref_state, atol=1e-4, rtol=1e-4)

    print("KERNEL_OK")
</pallas_src>

<mosaic_0001>
module attributes {stable_mosaic.version = 11 : i64} {
  func.func @_decoder_gru_kernel(%arg0: memref<64x16xf32, #tpu.memory_space<vmem>>, %arg1: memref<16x384xf32, #tpu.memory_space<vmem>>, %arg2: memref<128x384xf32, #tpu.memory_space<vmem>>, %arg3: memref<1x384xf32, #tpu.memory_space<vmem>>, %arg4: memref<1x128xf32, #tpu.memory_space<vmem>>, %arg5: memref<8x128xf32, #tpu.memory_space<vmem>>, %arg6: memref<128x128xf32, #tpu.memory_space<vmem>>, %arg7: memref<1x128xf32, #tpu.memory_space<vmem>>, %arg8: memref<64x128xf32, #tpu.memory_space<vmem>>, %arg9: memref<8x128xf32, #tpu.memory_space<vmem>>, %arg10: memref<64x128xf32, #tpu.memory_space<vmem>>) attributes {dimension_semantics = [], scalar_prefetch = 0 : i64, scratch_operands = 1 : i64, tpu.core_type = #tpu.core_type<tc>} {
    %c0 = arith.constant 0 : index
    %c0_0 = arith.constant 0 : index
    %0 = vector.load %arg0[%c0, %c0_0] : memref<64x16xf32, #tpu.memory_space<vmem>>, vector<64x16xf32>
    %c0_1 = arith.constant 0 : index
    %c0_2 = arith.constant 0 : index
    %1 = vector.load %arg1[%c0_1, %c0_2] : memref<16x384xf32, #tpu.memory_space<vmem>>, vector<16x384xf32>
    %cst = arith.constant dense<0.000000e+00> : vector<64x384xf32>
    %2 = tpu.matmul %0, %1, %cst {dimension_numbers = #tpu.dot_dimension_numbers<[1], [0], [0], [1], [0, 0, 1, 1], [], []>} : vector<64x16xf32>, vector<16x384xf32>, vector<64x384xf32> -> vector<64x384xf32>
    %c0_3 = arith.constant 0 : index
    %c0_4 = arith.constant 0 : index
    %3 = vector.load %arg3[%c0_3, %c0_4] : memref<1x384xf32, #tpu.memory_space<vmem>>, vector<1x384xf32>
    %4 = vector.broadcast %3 : vector<1x384xf32> to vector<64x384xf32>
    %5 = arith.addf %2, %4 : vector<64x384xf32>
    %c0_5 = arith.constant 0 : index
    %c0_6 = arith.constant 0 : index
    %6 = vector.load %arg2[%c0_5, %c0_6] : memref<128x384xf32, #tpu.memory_space<vmem>>, vector<128x384xf32>
    %c0_7 = arith.constant 0 : index
    %c0_8 = arith.constant 0 : index
    %7 = vector.load %arg4[%c0_7, %c0_8] : memref<1x128xf32, #tpu.memory_space<vmem>>, vector<1x128xf32>
    %c0_9 = arith.constant 0 : index
    %c0_10 = arith.constant 0 : index
    %8 = vector.load %arg5[%c0_9, %c0_10] : memref<8x128xf32, #tpu.memory_space<vmem>>, vector<8x128xf32>
    %cst_11 = arith.constant dense<0.000000e+00> : vector<8x384xf32>
    %9 = tpu.matmul %8, %6, %cst_11 {dimension_numbers = #tpu.dot_dimension_numbers<[1], [0], [0], [1], [0, 0, 1, 1], [], []>} : vector<8x128xf32>, vector<128x384xf32>, vector<8x384xf32> -> vector<8x384xf32>
    %10 = vector.extract_strided_slice %5 {offsets = [0, 0], sizes = [8, 384], strides = [1, 1]} : vector<64x384xf32> to vector<8x384xf32>
    %11 = vector.extract_strided_slice %10 {offsets = [0, 0], sizes = [8, 256], strides = [1, 1]} : vector<8x384xf32> to vector<8x256xf32>
    %12 = vector.extract_strided_slice %9 {offsets = [0, 0], sizes = [8, 256], strides = [1, 1]} : vector<8x384xf32> to vector<8x256xf32>
    %13 = arith.addf %11, %12 : vector<8x256xf32>
    %14 = arith.negf %13 : vector<8x256xf32>
    %15 = math.exp %14 : vector<8x256xf32>
    %cst_12 = arith.constant 1.000000e+00 : f32
    %16 = vector.broadcast %cst_12 : f32 to vector<8x256xf32>
    %17 = arith.addf %16, %15 : vector<8x256xf32>
    %18 = arith.divf %16, %17 : vector<8x256xf32>
    %19 = vector.extract_strided_slice %18 {offsets = [0, 0], sizes = [8, 128], strides = [1, 1]} : vector<8x256xf32> to vector<8x128xf32>
    %20 = vector.extract_strided_slice %18 {offsets = [0, 128], sizes = [8, 128], strides = [1, 1]} : vector<8x256xf32> to vector<8x128xf32>
    %21 = vector.extract_strided_slice %10 {offsets = [0, 256], sizes = [8, 128], strides = [1, 1]} : vector<8x384xf32> to vector<8x128xf32>
    %22 = vector.extract_strided_slice %9 {offsets = [0, 256], sizes = [8, 128], strides = [1, 1]} : vector<8x384xf32> to vector<8x128xf32>
    %23 = vector.broadcast %7 : vector<1x128xf32> to vector<8x128xf32>
    %24 = arith.addf %22, %23 : vector<8x128xf32>
    %25 = arith.mulf %19, %24 : vector<8x128xf32>
    %26 = arith.addf %21, %25 : vector<8x128xf32>
    %27 = math.tanh %26 : vector<8x128xf32>
    %cst_13 = arith.constant 1.000000e+00 : f32
    %28 = vector.broadcast %cst_13 : f32 to vector<8x128xf32>
    %29 = arith.subf %28, %20 : vector<8x128xf32>
    %30 = arith.mulf %29, %27 : vector<8x128xf32>
    %31 = arith.mulf %20, %8 : vector<8x128xf32>
    %32 = arith.addf %30, %31 : vector<8x128xf32>
    %c0_14 = arith.constant 0 : index
    %c0_15 = arith.constant 0 : index
    %33 = vector.load %arg10[%c0_14, %c0_15] : memref<64x128xf32, #tpu.memory_space<vmem>>, vector<8x128xf32>
    tpu.vector_store %arg10[%c0_14, %c0_15], %32 {strides = array<i32>} : memref<64x128xf32, #tpu.memory_space<vmem>>, vector<8x128xf32>,
    %cst_16 = arith.constant dense<0.000000e+00> : vector<8x384xf32>
    %34 = tpu.matmul %32, %6, %cst_16 {dimension_numbers = #tpu.dot_dimension_numbers<[1], [0], [0], [1], [0, 0, 1, 1], [], []>} : vector<8x128xf32>, vector<128x384xf32>, vector<8x384xf32> -> vector<8x384xf32>
    %35 = vector.extract_strided_slice %5 {offsets = [8, 0], sizes = [8, 384], strides = [1, 1]} : vector<64x384xf32> to vector<8x384xf32>
    %36 = vector.extract_strided_slice %35 {offsets = [0, 0], sizes = [8, 256], strides = [1, 1]} : vector<8x384xf32> to vector<8x256xf32>
    %37 = vector.extract_strided_slice %34 {offsets = [0, 0], sizes = [8, 256], strides = [1, 1]} : vector<8x384xf32> to vector<8x256xf32>
    %38 = arith.addf %36, %37 : vector<8x256xf32>
    %39 = arith.negf %38 : vector<8x256xf32>
    %40 = math.exp %39 : vector<8x256xf32>
    %cst_17 = arith.constant 1.000000e+00 : f32
    %41 = vector.broadcast %cst_17 : f32 to vector<8x256xf32>
    %42 = arith.addf %41, %40 : vector<8x256xf32>
    %43 = arith.divf %41, %42 : vector<8x256xf32>
    %44 = vector.extract_strided_slice %43 {offsets = [0, 0], sizes = [8, 128], strides = [1, 1]} : vector<8x256xf32> to vector<8x128xf32>
    %45 = vector.extract_strided_slice %43 {offsets = [0, 128], sizes = [8, 128], strides = [1, 1]} : vector<8x256xf32> to vector<8x128xf32>
    %46 = vector.extract_strided_slice %35 {offsets = [0, 256], sizes = [8, 128], strides = [1, 1]} : vector<8x384xf32> to vector<8x128xf32>
    %47 = vector.extract_strided_slice %34 {offsets = [0, 256], sizes = [8, 128], strides = [1, 1]} : vector<8x384xf32> to vector<8x128xf32>
    %48 = vector.broadcast %7 : vector<1x128xf32> to vector<8x128xf32>
    %49 = arith.addf %47, %48 : vector<8x128xf32>
    %50 = arith.mulf %44, %49 : vector<8x128xf32>
    %51 = arith.addf %46, %50 : vector<8x128xf32>
    %52 = math.tanh %51 : vector<8x128xf32>
    %cst_18 = arith.constant 1.000000e+00 : f32
    %53 = vector.broadcast %cst_18 : f32 to vector<8x128xf32>
    %54 = arith.subf %53, %45 : vector<8x128xf32>
    %55 = arith.mulf %54, %52 : vector<8x128xf32>
    %56 = arith.mulf %45, %32 : vector<8x128xf32>
    %57 = arith.addf %55, %56 : vector<8x128xf32>
    %c8 = arith.constant 8 : index
    %c0_19 = arith.constant 0 : index
    %58 = vector.load %arg10[%c8, %c0_19] : memref<64x128xf32, #tpu.memory_space<vmem>>, vector<8x128xf32>
    tpu.vector_store %arg10[%c8, %c0_19], %57 {strides = array<i32>} : memref<64x128xf32, #tpu.memory_space<vmem>>, vector<8x128xf32>,
    %cst_20 = arith.constant dense<0.000000e+00> : vector<8x384xf32>
    %59 = tpu.matmul %57, %6, %cst_20 {dimension_numbers = #tpu.dot_dimension_numbers<[1], [0], [0], [1], [0, 0, 1, 1], [], []>} : vector<8x128xf32>, vector<128x384xf32>, vector<8x384xf32> -> vector<8x384xf32>
    %60 = vector.extract_strided_slice %5 {offsets = [16, 0], sizes = [8, 384], strides = [1, 1]} : vector<64x384xf32> to vector<8x384xf32>
    %61 = vector.extract_strided_slice %60 {offsets = [0, 0], sizes = [8, 256], strides = [1, 1]} : vector<8x384xf32> to vector<8x256xf32>
    %62 = vector.extract_strided_slice %59 {offsets = [0, 0], sizes = [8, 256], strides = [1, 1]} : vector<8x384xf32> to vector<8x256xf32>
    %63 = arith.addf %61, %62 : vector<8x256xf32>
    %64 = arith.negf %63 : vector<8x256xf32>
    %65 = math.exp %64 : vector<8x256xf32>
    %cst_21 = arith.constant 1.000000e+00 : f32
    %66 = vector.broadcast %cst_21 : f32 to vector<8x256xf32>
    %67 = arith.addf %66, %65 : vector<8x256xf32>
    %68 = arith.divf %66, %67 : vector<8x256xf32>
    %69 = vector.extract_strided_slice %68 {offsets = [0, 0], sizes = [8, 128], strides = [1, 1]} : vector<8x256xf32> to vector<8x128xf32>
    %70 = vector.extract_strided_slice %68 {offsets = [0, 128], sizes = [8, 128], strides = [1, 1]} : vector<8x256xf32> to vector<8x128xf32>
    %71 = vector.extract_strided_slice %60 {offsets = [0, 256], sizes = [8, 128], strides = [1, 1]} : vector<8x384xf32> to vector<8x128xf32>
    %72 = vector.extract_strided_slice %59 {offsets = [0, 256], sizes = [8, 128], strides = [1, 1]} : vector<8x384xf32> to vector<8x128xf32>
    %73 = vector.broadcast %7 : vector<1x128xf32> to vector<8x128xf32>
    %74 = arith.addf %72, %73 : vector<8x128xf32>
    %75 = arith.mulf %69, %74 : vector<8x128xf32>
    %76 = arith.addf %71, %75 : vector<8x128xf32>
    %77 = math.tanh %76 : vector<8x128xf32>
    %cst_22 = arith.constant 1.000000e+00 : f32
    %78 = vector.broadcast %cst_22 : f32 to vector<8x128xf32>
    %79 = arith.subf %78, %70 : vector<8x128xf32>
    %80 = arith.mulf %79, %77 : vector<8x128xf32>
    %81 = arith.mulf %70, %57 : vector<8x128xf32>
    %82 = arith.addf %80, %81 : vector<8x128xf32>
    %c16 = arith.constant 16 : index
    %c0_23 = arith.constant 0 : index
    %83 = vector.load %arg10[%c16, %c0_23] : memref<64x128xf32, #tpu.memory_space<vmem>>, vector<8x128xf32>
    tpu.vector_store %arg10[%c16, %c0_23], %82 {strides = array<i32>} : memref<64x128xf32, #tpu.memory_space<vmem>>, vector<8x128xf32>,
    %cst_24 = arith.constant dense<0.000000e+00> : vector<8x384xf32>
    %84 = tpu.matmul %82, %6, %cst_24 {dimension_numbers = #tpu.dot_dimension_numbers<[1], [0], [0], [1], [0, 0, 1, 1], [], []>} : vector<8x128xf32>, vector<128x384xf32>, vector<8x384xf32> -> vector<8x384xf32>
    %85 = vector.extract_strided_slice %5 {offsets = [24, 0], sizes = [8, 384], strides = [1, 1]} : vector<64x384xf32> to vector<8x384xf32>
    %86 = vector.extract_strided_slice %85 {offsets = [0, 0], sizes = [8, 256], strides = [1, 1]} : vector<8x384xf32> to vector<8x256xf32>
    %87 = vector.extract_strided_slice %84 {offsets = [0, 0], sizes = [8, 256], strides = [1, 1]} : vector<8x384xf32> to vector<8x256xf32>
    %88 = arith.addf %86, %87 : vector<8x256xf32>
    %89 = arith.negf %88 : vector<8x256xf32>
    %90 = math.exp %89 : vector<8x256xf32>
    %cst_25 = arith.constant 1.000000e+00 : f32
    %91 = vector.broadcast %cst_25 : f32 to vector<8x256xf32>
    %92 = arith.addf %91, %90 : vector<8x256xf32>
    %93 = arith.divf %91, %92 : vector<8x256xf32>
    %94 = vector.extract_strided_slice %93 {offsets = [0, 0], sizes = [8, 128], strides = [1, 1]} : vector<8x256xf32> to vector<8x128xf32>
    %95 = vector.extract_strided_slice %93 {offsets = [0, 128], sizes = [8, 128], strides = [1, 1]} : vector<8x256xf32> to vector<8x128xf32>
    %96 = vector.extract_strided_slice %85 {offsets = [0, 256], sizes = [8, 128], strides = [1, 1]} : vector<8x384xf32> to vector<8x128xf32>
    %97 = vector.extract_strided_slice %84 {offsets = [0, 256], sizes = [8, 128], strides = [1, 1]} : vector<8x384xf32> to vector<8x128xf32>
    %98 = vector.broadcast %7 : vector<1x128xf32> to vector<8x128xf32>
    %99 = arith.addf %97, %98 : vector<8x128xf32>
    %100 = arith.mulf %94, %99 : vector<8x128xf32>
    %101 = arith.addf %96, %100 : vector<8x128xf32>
    %102 = math.tanh %101 : vector<8x128xf32>
    %cst_26 = arith.constant 1.000000e+00 : f32
    %103 = vector.broadcast %cst_26 : f32 to vector<8x128xf32>
    %104 = arith.subf %103, %95 : vector<8x128xf32>
    %105 = arith.mulf %104, %102 : vector<8x128xf32>
    %106 = arith.mulf %95, %82 : vector<8x128xf32>
    %107 = arith.addf %105, %106 : vector<8x128xf32>
    %c24 = arith.constant 24 : index
    %c0_27 = arith.constant 0 : index
    %108 = vector.load %arg10[%c24, %c0_27] : memref<64x128xf32, #tpu.memory_space<vmem>>, vector<8x128xf32>
    tpu.vector_store %arg10[%c24, %c0_27], %107 {strides = array<i32>} : memref<64x128xf32, #tpu.memory_space<vmem>>, vector<8x128xf32>,
    %cst_28 = arith.constant dense<0.000000e+00> : vector<8x384xf32>
    %109 = tpu.matmul %107, %6, %cst_28 {dimension_numbers = #tpu.dot_dimension_numbers<[1], [0], [0], [1], [0, 0, 1, 1], [], []>} : vector<8x128xf32>, vector<128x384xf32>, vector<8x384xf32> -> vector<8x384xf32>
    %110 = vector.extract_strided_slice %5 {offsets = [32, 0], sizes = [8, 384], strides = [1, 1]} : vector<64x384xf32> to vector<8x384xf32>
    %111 = vector.extract_strided_slice %110 {offsets = [0, 0], sizes = [8, 256], strides = [1, 1]} : vector<8x384xf32> to vector<8x256xf32>
    %112 = vector.extract_strided_slice %109 {offsets = [0, 0], sizes = [8, 256], strides = [1, 1]} : vector<8x384xf32> to vector<8x256xf32>
    %113 = arith.addf %111, %112 : vector<8x256xf32>
    %114 = arith.negf %113 : vector<8x256xf32>
    %115 = math.exp %114 : vector<8x256xf32>
    %cst_29 = arith.constant 1.000000e+00 : f32
    %116 = vector.broadcast %cst_29 : f32 to vector<8x256xf32>
    %117 = arith.addf %116, %115 : vector<8x256xf32>
    %118 = arith.divf %116, %117 : vector<8x256xf32>
    %119 = vector.extract_strided_slice %118 {offsets = [0, 0], sizes = [8, 128], strides = [1, 1]} : vector<8x256xf32> to vector<8x128xf32>
    %120 = vector.extract_strided_slice %118 {offsets = [0, 128], sizes = [8, 128], strides = [1, 1]} : vector<8x256xf32> to vector<8x128xf32>
    %121 = vector.extract_strided_slice %110 {offsets = [0, 256], sizes = [8, 128], strides = [1, 1]} : vector<8x384xf32> to vector<8x128xf32>
    %122 = vector.extract_strided_slice %109 {offsets = [0, 256], sizes = [8, 128], strides = [1, 1]} : vector<8x384xf32> to vector<8x128xf32>
    %123 = vector.broadcast %7 : vector<1x128xf32> to vector<8x128xf32>
    %124 = arith.addf %122, %123 : vector<8x128xf32>
    %125 = arith.mulf %119, %124 : vector<8x128xf32>
    %126 = arith.addf %121, %125 : vector<8x128xf32>
    %127 = math.tanh %126 : vector<8x128xf32>
    %cst_30 = arith.constant 1.000000e+00 : f32
    %128 = vector.broadcast %cst_30 : f32 to vector<8x128xf32>
    %129 = arith.subf %128, %120 : vector<8x128xf32>
    %130 = arith.mulf %129, %127 : vector<8x128xf32>
    %131 = arith.mulf %120, %107 : vector<8x128xf32>
    %132 = arith.addf %130, %131 : vector<8x128xf32>
    %c32 = arith.constant 32 : index
    %c0_31 = arith.constant 0 : index
    %133 = vector.load %arg10[%c32, %c0_31] : memref<64x128xf32, #tpu.memory_space<vmem>>, vector<8x128xf32>
    tpu.vector_store %arg10[%c32, %c0_31], %132 {strides = array<i32>} : memref<64x128xf32, #tpu.memory_space<vmem>>, vector<8x128xf32>,
    %cst_32 = arith.constant dense<0.000000e+00> : vector<8x384xf32>
    %134 = tpu.matmul %132, %6, %cst_32 {dimension_numbers = #tpu.dot_dimension_numbers<[1], [0], [0], [1], [0, 0, 1, 1], [], []>} : vector<8x128xf32>, vector<128x384xf32>, vector<8x384xf32> -> vector<8x384xf32>
    %135 = vector.extract_strided_slice %5 {offsets = [40, 0], sizes = [8, 384], strides = [1, 1]} : vector<64x384xf32> to vector<8x384xf32>
    %136 = vector.extract_strided_slice %135 {offsets = [0, 0], sizes = [8, 256], strides = [1, 1]} : vector<8x384xf32> to vector<8x256xf32>
    %137 = vector.extract_strided_slice %134 {offsets = [0, 0], sizes = [8, 256], strides = [1, 1]} : vector<8x384xf32> to vector<8x256xf32>
    %138 = arith.addf %136, %137 : vector<8x256xf32>
    %139 = arith.negf %138 : vector<8x256xf32>
    %140 = math.exp %139 : vector<8x256xf32>
    %cst_33 = arith.constant 1.000000e+00 : f32
    %141 = vector.broadcast %cst_33 : f32 to vector<8x256xf32>
    %142 = arith.addf %141, %140 : vector<8x256xf32>
    %143 = arith.divf %141, %142 : vector<8x256xf32>
    %144 = vector.extract_strided_slice %143 {offsets = [0, 0], sizes = [8, 128], strides = [1, 1]} : vector<8x256xf32> to vector<8x128xf32>
    %145 = vector.extract_strided_slice %143 {offsets = [0, 128], sizes = [8, 128], strides = [1, 1]} : vector<8x256xf32> to vector<8x128xf32>
    %146 = vector.extract_strided_slice %135 {offsets = [0, 256], sizes = [8, 128], strides = [1, 1]} : vector<8x384xf32> to vector<8x128xf32>
    %147 = vector.extract_strided_slice %134 {offsets = [0, 256], sizes = [8, 128], strides = [1, 1]} : vector<8x384xf32> to vector<8x128xf32>
    %148 = vector.broadcast %7 : vector<1x128xf32> to vector<8x128xf32>
    %149 = arith.addf %147, %148 : vector<8x128xf32>
    %150 = arith.mulf %144, %149 : vector<8x128xf32>
    %151 = arith.addf %146, %150 : vector<8x128xf32>
    %152 = math.tanh %151 : vector<8x128xf32>
    %cst_34 = arith.constant 1.000000e+00 : f32
    %153 = vector.broadcast %cst_34 : f32 to vector<8x128xf32>
    %154 = arith.subf %153, %145 : vector<8x128xf32>
    %155 = arith.mulf %154, %152 : vector<8x128xf32>
    %156 = arith.mulf %145, %132 : vector<8x128xf32>
    %157 = arith.addf %155, %156 : vector<8x128xf32>
    %c40 = arith.constant 40 : index
    %c0_35 = arith.constant 0 : index
    %158 = vector.load %arg10[%c40, %c0_35] : memref<64x128xf32, #tpu.memory_space<vmem>>, vector<8x128xf32>
    tpu.vector_store %arg10[%c40, %c0_35], %157 {strides = array<i32>} : memref<64x128xf32, #tpu.memory_space<vmem>>, vector<8x128xf32>,
    %cst_36 = arith.constant dense<0.000000e+00> : vector<8x384xf32>
    %159 = tpu.matmul %157, %6, %cst_36 {dimension_numbers = #tpu.dot_dimension_numbers<[1], [0], [0], [1], [0, 0, 1, 1], [], []>} : vector<8x128xf32>, vector<128x384xf32>, vector<8x384xf32> -> vector<8x384xf32>
    %160 = vector.extract_strided_slice %5 {offsets = [48, 0], sizes = [8, 384], strides = [1, 1]} : vector<64x384xf32> to vector<8x384xf32>
    %161 = vector.extract_strided_slice %160 {offsets = [0, 0], sizes = [8, 256], strides = [1, 1]} : vector<8x384xf32> to vector<8x256xf32>
    %162 = vector.extract_strided_slice %159 {offsets = [0, 0], sizes = [8, 256], strides = [1, 1]} : vector<8x384xf32> to vector<8x256xf32>
    %163 = arith.addf %161, %162 : vector<8x256xf32>
    %164 = arith.negf %163 : vector<8x256xf32>
    %165 = math.exp %164 : vector<8x256xf32>
    %cst_37 = arith.constant 1.000000e+00 : f32
    %166 = vector.broadcast %cst_37 : f32 to vector<8x256xf32>
    %167 = arith.addf %166, %165 : vector<8x256xf32>
    %168 = arith.divf %166, %167 : vector<8x256xf32>
    %169 = vector.extract_strided_slice %168 {offsets = [0, 0], sizes = [8, 128], strides = [1, 1]} : vector<8x256xf32> to vector<8x128xf32>
    %170 = vector.extract_strided_slice %168 {offsets = [0, 128], sizes = [8, 128], strides = [1, 1]} : vector<8x256xf32> to vector<8x128xf32>
    %171 = vector.extract_strided_slice %160 {offsets = [0, 256], sizes = [8, 128], strides = [1, 1]} : vector<8x384xf32> to vector<8x128xf32>
    %172 = vector.extract_strided_slice %159 {offsets = [0, 256], sizes = [8, 128], strides = [1, 1]} : vector<8x384xf32> to vector<8x128xf32>
    %173 = vector.broadcast %7 : vector<1x128xf32> to vector<8x128xf32>
    %174 = arith.addf %172, %173 : vector<8x128xf32>
    %175 = arith.mulf %169, %174 : vector<8x128xf32>
    %176 = arith.addf %171, %175 : vector<8x128xf32>
    %177 = math.tanh %176 : vector<8x128xf32>
    %cst_38 = arith.constant 1.000000e+00 : f32
    %178 = vector.broadcast %cst_38 : f32 to vector<8x128xf32>
    %179 = arith.subf %178, %170 : vector<8x128xf32>
    %180 = arith.mulf %179, %177 : vector<8x128xf32>
    %181 = arith.mulf %170, %157 : vector<8x128xf32>
    %182 = arith.addf %180, %181 : vector<8x128xf32>
    %c48 = arith.constant 48 : index
    %c0_39 = arith.constant 0 : index
    %183 = vector.load %arg10[%c48, %c0_39] : memref<64x128xf32, #tpu.memory_space<vmem>>, vector<8x128xf32>
    tpu.vector_store %arg10[%c48, %c0_39], %182 {strides = array<i32>} : memref<64x128xf32, #tpu.memory_space<vmem>>, vector<8x128xf32>,
    %cst_40 = arith.constant dense<0.000000e+00> : vector<8x384xf32>
    %184 = tpu.matmul %182, %6, %cst_40 {dimension_numbers = #tpu.dot_dimension_numbers<[1], [0], [0], [1], [0, 0, 1, 1], [], []>} : vector<8x128xf32>, vector<128x384xf32>, vector<8x384xf32> -> vector<8x384xf32>
    %185 = vector.extract_strided_slice %5 {offsets = [56, 0], sizes = [8, 384], strides = [1, 1]} : vector<64x384xf32> to vector<8x384xf32>
    %186 = vector.extract_strided_slice %185 {offsets = [0, 0], sizes = [8, 256], strides = [1, 1]} : vector<8x384xf32> to vector<8x256xf32>
    %187 = vector.extract_strided_slice %184 {offsets = [0, 0], sizes = [8, 256], strides = [1, 1]} : vector<8x384xf32> to vector<8x256xf32>
    %188 = arith.addf %186, %187 : vector<8x256xf32>
    %189 = arith.negf %188 : vector<8x256xf32>
    %190 = math.exp %189 : vector<8x256xf32>
    %cst_41 = arith.constant 1.000000e+00 : f32
    %191 = vector.broadcast %cst_41 : f32 to vector<8x256xf32>
    %192 = arith.addf %191, %190 : vector<8x256xf32>
    %193 = arith.divf %191, %192 : vector<8x256xf32>
    %194 = vector.extract_strided_slice %193 {offsets = [0, 0], sizes = [8, 128], strides = [1, 1]} : vector<8x256xf32> to vector<8x128xf32>
    %195 = vector.extract_strided_slice %193 {offsets = [0, 128], sizes = [8, 128], strides = [1, 1]} : vector<8x256xf32> to vector<8x128xf32>
    %196 = vector.extract_strided_slice %185 {offsets = [0, 256], sizes = [8, 128], strides = [1, 1]} : vector<8x384xf32> to vector<8x128xf32>
    %197 = vector.extract_strided_slice %184 {offsets = [0, 256], sizes = [8, 128], strides = [1, 1]} : vector<8x384xf32> to vector<8x128xf32>
    %198 = vector.broadcast %7 : vector<1x128xf32> to vector<8x128xf32>
    %199 = arith.addf %197, %198 : vector<8x128xf32>
    %200 = arith.mulf %194, %199 : vector<8x128xf32>
    %201 = arith.addf %196, %200 : vector<8x128xf32>
    %202 = math.tanh %201 : vector<8x128xf32>
    %cst_42 = arith.constant 1.000000e+00 : f32
    %203 = vector.broadcast %cst_42 : f32 to vector<8x128xf32>
    %204 = arith.subf %203, %195 : vector<8x128xf32>
    %205 = arith.mulf %204, %202 : vector<8x128xf32>
    %206 = arith.mulf %195, %182 : vector<8x128xf32>
    %207 = arith.addf %205, %206 : vector<8x128xf32>
    %c56 = arith.constant 56 : index
    %c0_43 = arith.constant 0 : index
    %208 = vector.load %arg10[%c56, %c0_43] : memref<64x128xf32, #tpu.memory_space<vmem>>, vector<8x128xf32>
    tpu.vector_store %arg10[%c56, %c0_43], %207 {strides = array<i32>} : memref<64x128xf32, #tpu.memory_space<vmem>>, vector<8x128xf32>,
    %c0_44 = arith.constant 0 : index
    %c0_45 = arith.constant 0 : index
    %209 = vector.load %arg9[%c0_44, %c0_45] : memref<8x128xf32, #tpu.memory_space<vmem>>, vector<8x128xf32>
    tpu.vector_store %arg9[%c0_44, %c0_45], %207 {strides = array<i32>} : memref<8x128xf32, #tpu.memory_space<vmem>>, vector<8x128xf32>,
    %c0_46 = arith.constant 0 : index
    %c0_47 = arith.constant 0 : index
    %210 = vector.load %arg10[%c0_46, %c0_47] : memref<64x128xf32, #tpu.memory_space<vmem>>, vector<64x128xf32>
    %c0_48 = arith.constant 0 : index
    %c0_49 = arith.constant 0 : index
    %211 = vector.load %arg6[%c0_48, %c0_49] : memref<128x128xf32, #tpu.memory_space<vmem>>, vector<128x128xf32>
    %cst_50 = arith.constant dense<0.000000e+00> : vector<64x128xf32>
    %212 = tpu.matmul %210, %211, %cst_50 {dimension_numbers = #tpu.dot_dimension_numbers<[1], [0], [0], [1], [0, 0, 1, 1], [], []>} : vector<64x128xf32>, vector<128x128xf32>, vector<64x128xf32> -> vector<64x128xf32>
    %c0_51 = arith.constant 0 : index
    %c0_52 = arith.constant 0 : index
    %213 = vector.load %arg7[%c0_51, %c0_52] : memref<1x128xf32, #tpu.memory_space<vmem>>, vector<1x128xf32>
    %214 = vector.broadcast %213 : vector<1x128xf32> to vector<64x128xf32>
    %215 = arith.addf %212, %214 : vector<64x128xf32>
    %c0_53 = arith.constant 0 : index
    %c0_54 = arith.constant 0 : index
    %216 = vector.load %arg8[%c0_53, %c0_54] : memref<64x128xf32, #tpu.memory_space<vmem>>, vector<64x128xf32>
    tpu.vector_store %arg8[%c0_53, %c0_54], %215 {strides = array<i32>} : memref<64x128xf32, #tpu.memory_space<vmem>>, vector<64x128xf32>,
    return
  }
}

</mosaic_0001>

<llo_original>
// kernel: tpu_custom_call.1
$region0: #{tpu_custom_call.1}
  #allocation0 [shape = 'u32[]', space=smem, size = 0x4, offset = 0x4, fixed_abs, tag = 'smem constant byte address 0x4 - core index']
  #allocation1 [shape = 'u32[144,128]{1,0:T(1,128)}', space=vmem, size = 0x12000, scoped, tag = 'internal scratch']
  #allocation2 [shape = 'f32[64,128]{1,0:T(8,128)}', space=vmem, size = 0x8000, scoped, tag = 'scratch operand']
  %s0 = inlined_call_operand.vmem [shape: f32[64,16], index: 0, kind: input, shape index: {}]
  %s1 = inlined_call_operand.vmem [shape: f32[16,384], index: 1, kind: input, shape index: {}]
  %s2 = inlined_call_operand.hbm [shape: f32[128,384], index: 2, kind: input, shape index: {}]
  %s3 = inlined_call_operand.vmem [shape: f32[1,384], index: 3, kind: input, shape index: {}]
  %s4 = inlined_call_operand.vmem [shape: f32[1,128], index: 4, kind: input, shape index: {}]
  %s5 = inlined_call_operand.vmem [shape: f32[8,128], index: 5, kind: input, shape index: {}]
  %s6 = inlined_call_operand.hbm [shape: f32[128,128], index: 6, kind: input, shape index: {}]
  %s7 = inlined_call_operand.vmem [shape: f32[1,128], index: 7, kind: input, shape index: {}]
  %s8 = inlined_call_operand.hbm [shape: f32[64,128], index: 8, kind: output, shape index: {0}]
  %s9 = inlined_call_operand.hbm [shape: f32[8,128], index: 9, kind: output, shape index: {1}]
  %10 = xla_tuple %s8, %s9
  %s11 = sld [smem:[#allocation0]]
  $region58: #{tpu_custom_call.1} parent=0
    _
  %s13 = ssub.s32 1, %s11
  %s14 = scalar_select 0, %s13, %s11
  $region1: #{tpu_custom_call.1} parent=0
    #allocation3 [shape = 'u8[196608]{0}', space=vmem, size = 0x30000, scoped, tag = 'input window, operand 2, single buffered']
    #allocation4 [shape = 's32[1]{0}', space=sflag, size = 0x4, scoped, tag = 'scoped memory for tpu_custom_call.1']
    #allocation5 [shape = 's32[1]{0}', space=sflag, size = 0x4, scoped, tag = 'scoped memory for tpu_custom_call.1']
    #allocation6 [shape = 'u8[65536]{0}', space=vmem, size = 0x10000, scoped, tag = 'input window, operand 6, single buffered']
    #allocation7 [shape = 's32[1]{0}', space=sflag, size = 0x4, scoped, tag = 'scoped memory for tpu_custom_call.1']
    #allocation8 [shape = 'u8[32768]{0}', space=vmem, size = 0x8000, scoped, tag = 'output window, operand 0, single buffered']
    #allocation9 [shape = 'u8[4096]{0}', space=vmem, size = 0x1000, scoped, tag = 'output window, operand 1, single buffered']
    #allocation10 [shape = 's32[1]{0}', space=sflag, size = 0x4, scoped, tag = 'scoped memory for tpu_custom_call.1']
    %15 = vsyncpa [#allocation4], 0
    %16 = vsyncpa [#allocation7], 0
    %17 = vsyncpa [#allocation5], 0
    %18 = vsyncpa [#allocation10], 0
    // Predicated region
    $region2: #{tpu_custom_call.1} parent=1 // pred_check
      _
    $region3: #{tpu_custom_call.1} parent=1 // pred_check_branch
      %20 = sbr.rel (0) target = $region5
    $region4: #{tpu_custom_call.1} parent=1 // pred_region
      _
    $region5: #{tpu_custom_call.1} parent=1 // pred_fallthru
      _
    // Predicated region
    $region6: #{tpu_custom_call.1} parent=1 // pred_check
      _
    $region7: #{tpu_custom_call.1} parent=1 // pred_check_branch
      %22 = sbr.rel (0) target = $region9
    $region8: #{tpu_custom_call.1} parent=1 // pred_region
      _
    $region9: #{tpu_custom_call.1} parent=1 // pred_fallthru
      _
    // Predicated region
    $region10: #{tpu_custom_call.1} parent=1 // pred_check
      _
    $region11: #{tpu_custom_call.1} parent=1 // pred_check_branch
      %24 = sbr.rel (0) target = $region13
    $region12: #{tpu_custom_call.1} parent=1 // pred_region
      %s26 = ssub.s32 6144, 6144
      %27 = vsyncadd [#allocation4], %s26
      %s28 = sshll.u32 [#allocation3], 4
      %s29 = int_to_ptr.vmem [resolvable:$true] %s28
      %34 = dma.hbm_to_vmem [thread:$0]  %s2, 6144, %s29, [#allocation4], 384, 384, 24
    $region13: #{tpu_custom_call.1} parent=1 // pred_fallthru
      _
    // Predicated region
    $region14: #{tpu_custom_call.1} parent=1 // pred_check
      _
    $region15: #{tpu_custom_call.1} parent=1 // pred_check_branch
      %36 = sbr.rel (0) target = $region17
    $region16: #{tpu_custom_call.1} parent=1 // pred_region
      _
    $region17: #{tpu_custom_call.1} parent=1 // pred_fallthru
      _
    // Predicated region
    $region18: #{tpu_custom_call.1} parent=1 // pred_check
      _
    $region19: #{tpu_custom_call.1} parent=1 // pred_check_branch
      %38 = sbr.rel (0) target = $region21
    $region20: #{tpu_custom_call.1} parent=1 // pred_region
      _
    $region21: #{tpu_custom_call.1} parent=1 // pred_fallthru
      _
    // Predicated region
    $region22: #{tpu_custom_call.1} parent=1 // pred_check
      _
    $region23: #{tpu_custom_call.1} parent=1 // pred_check_branch
      %40 = sbr.rel (0) target = $region25
    $region24: #{tpu_custom_call.1} parent=1 // pred_region
      _
    $region25: #{tpu_custom_call.1} parent=1 // pred_fallthru
      _
    // Predicated region
    $region26: #{tpu_custom_call.1} parent=1 // pred_check
      _
    $region27: #{tpu_custom_call.1} parent=1 // pred_check_branch
      %42 = sbr.rel (0) target = $region29
    $region28: #{tpu_custom_call.1} parent=1 // pred_region
      %s44 = ssub.s32 2048, 2048
      %45 = vsyncadd [#allocation7], %s44
      %s46 = sshll.u32 [#allocation6], 4
      %s47 = int_to_ptr.vmem [resolvable:$true] %s46
      %52 = dma.hbm_to_vmem [thread:$0]  %s6, 2048, %s47, [#allocation7], 128, 128, 8
    $region29: #{tpu_custom_call.1} parent=1 // pred_fallthru
      _
    // Predicated region
    $region30: #{tpu_custom_call.1} parent=1 // pred_check
      _
    $region31: #{tpu_custom_call.1} parent=1 // pred_check_branch
      %54 = sbr.rel (0) target = $region33
    $region32: #{tpu_custom_call.1} parent=1 // pred_region
      _
    $region33: #{tpu_custom_call.1} parent=1 // pred_fallthru
      _
    // Predicated region
    $region34: #{tpu_custom_call.1} parent=1 // pred_check
      _
    $region35: #{tpu_custom_call.1} parent=1 // pred_check_branch
      %56 = sbr.rel (0) target = $region37
    $region36: #{tpu_custom_call.1} parent=1 // pred_region
      %57 = dma.done [#allocation4], 6144
    $region37: #{tpu_custom_call.1} parent=1 // pred_fallthru
      _
    // Predicated region
    $region38: #{tpu_custom_call.1} parent=1 // pred_check
      _
    $region39: #{tpu_custom_call.1} parent=1 // pred_check_branch
      %59 = sbr.rel (0) target = $region41
    $region40: #{tpu_custom_call.1} parent=1 // pred_region
      %60 = dma.done [#allocation7], 2048
    $region41: #{tpu_custom_call.1} parent=1 // pred_fallthru
      _
    %v61 = vld [vmem:[%s0] sm:$0xff]
    %v62 = vld [vmem:[%s0 + $0x8] sm:$0xff]
    %v63 = vld [vmem:[%s0 + $0x10] sm:$0xff]
    %v64 = vld [vmem:[%s0 + $0x18] sm:$0xff]
    %v65 = vld [vmem:[%s0 + $0x20] sm:$0xff]
    %v66 = vld [vmem:[%s0 + $0x28] sm:$0xff]
    %v67 = vld [vmem:[%s0 + $0x30] sm:$0xff]
    %v68 = vld [vmem:[%s0 + $0x38] sm:$0xff]
    %v69 = vld [vmem:[%s1] sm:$0xff]
    %v70 = vld [vmem:[%s1 + $0x8] sm:$0xff]
    %v71 = vld [vmem:[%s1 + $0x10] sm:$0xff]
    %v72 = vld [vmem:[%s1 + $0x18] sm:$0xff]
    %v73 = vld [vmem:[%s1 + $0x20] sm:$0xff]
    %v74 = vld [vmem:[%s1 + $0x28] sm:$0xff]
    %v75 = vld [vmem:[%s3] sm:$0x7]
    %v77 = vlaneseq
    %v78 = vshrl.u32 %v77, 7
    %v79 = vsub.s32 0, %v78
    %v80 = vrot.slane %v75, %v79
    %v81 = vlaneseq
    %v82 = vshrl.u32 %v81, 7
    %v83 = vsub.s32 1, %v82
    %v84 = vrot.slane %v75, %v83
    %v85 = vlaneseq
    %v86 = vshrl.u32 %v85, 7
    %v87 = vsub.s32 2, %v86
    %v88 = vrot.slane %v75, %v87
    %vm92 = vcmask 130048
    %v94 = vsel %vm92, %v61, 0
    %v97 = vsel %vm92, %v62, 0
    %v100 = vsel %vm92, %v63, 0
    %v103 = vsel %vm92, %v64, 0
    %v106 = vsel %vm92, %v65, 0
    %v109 = vsel %vm92, %v66, 0
    %v112 = vsel %vm92, %v67, 0
    %v115 = vsel %vm92, %v68, 0
    %117 = vmatprep.subr.mxu0 %v70
    %118 = vmatpush1.msra.mxu0 %v69
    %119 = vmatprep.subr.mxu0 %v73
    %120 = vmatpush1.msra.mxu0 %v72
    %121 = vmatprep.subr.mxu0 0.0
    %122 = vmatpush1.msra.mxu0 0.0
    %123 = vmatprep.subr.mxu0 0.0
    %124 = vmatpush1.msra.mxu0 0.0
    %125 = vmatprep.subr.mxu0 0.0
    %126 = vmatpush1.msra.mxu0 0.0
    %127 = vmatprep.subr.mxu0 0.0
    %128 = vmatpush1.msra.mxu0 0.0
    %129 = vmatprep.subr.mxu0 0.0
    %130 = vmatpush1.msra.mxu0 0.0
    %131 = vmatprep.subr.mxu0 0.0
    %132 = vmatpush1.msra.mxu0 0.0
    %133 = vmatprep.subr.mxu0 0.0
    %134 = vmatpush1.msra.mxu0 0.0
    %135 = vmatprep.subr.mxu0 0.0
    %136 = vmatpush1.msra.mxu0 0.0
    %137 = vmatprep.subr.mxu0 0.0
    %138 = vmatpush1.msra.mxu0 0.0
    %139 = vmatprep.subr.mxu0 0.0
    %140 = vmatpush1.msra.mxu0 0.0
    %141 = vmatprep.subr.mxu0 0.0
    %142 = vmatpush1.msra.mxu0 0.0
    %143 = vmatprep.subr.mxu0 0.0
    %144 = vmatpush1.msra.mxu0 0.0
    %145 = vmatprep.subr.mxu0 0.0
    %146 = vmatpush1.msra.mxu0 0.0
    %147 = vmatprep.subr.mxu0 0.0
    %148 = vmatpush1.msra.mxu0 0.0
    %149 = vmatprep.subr.mxu0 0.0
    %150 = vmatpush1.msra.mxu0 0.0
    %151 = vmatprep.subr.mxu0 0.0
    %152 = vmatpush1.msra.mxu0 0.0
    %153 = vmatprep.subr.mxu0 0.0
    %154 = vmatpush1.msra.mxu0 0.0
    %155 = vmatprep.subr.mxu0 0.0
    %156 = vmatpush1.msra.mxu0 0.0
    %157 = vmatprep.subr.mxu0 0.0
    %158 = vmatpush1.msra.mxu0 0.0
    %159 = vmatprep.subr.mxu0 0.0
    %160 = vmatpush1.msra.mxu0 0.0
    %161 = vmatprep.subr.mxu0 0.0
    %162 = vmatpush1.msra.mxu0 0.0
    %163 = vmatprep.subr.mxu0 0.0
    %164 = vmatpush1.msra.mxu0 0.0
    %165 = vmatprep.subr.mxu0 0.0
    %166 = vmatpush1.msra.mxu0 0.0
    %167 = vmatprep.subr.mxu0 0.0
    %168 = vmatpush1.msra.mxu0 0.0
    %169 = vmatprep.subr.mxu0 0.0
    %170 = vmatpush1.msra.mxu0 0.0
    %171 = vmatprep.subr.mxu0 0.0
    %172 = vmatpush1.msra.mxu0 0.0
    %173 = vmatprep.subr.mxu0 0.0
    %174 = vmatpush1.msra.mxu0 0.0
    %175 = vmatprep.subr.mxu0 0.0
    %176 = vmatpush1.msra.mxu0 0.0
    %177 = vmatprep.subr.mxu0 0.0
    %178 = vmatpush1.msra.mxu0 0.0
    %179 = vmatprep.subr.mxu0 0.0
    %180 = vmatpush1.msra.mxu0 0.0
    %181 = vmatprep.mubr.f32.mxu0 0.0
    %182 = vmatmul.mubr.f32.gmra.mrb[0].mxu0 %v94
    %v183 = vpop.f32.mrb[0].mxu0
    %v184 = vadd.f32 %v80, %v183
    %v185 = vpop.f32.mrb[0].mxu0
    %v186 = vadd.f32 %v84, %v185
    %187 = vmatprep.mubr.f32.mxu0 0.0
    %188 = vmatmul.mubr.f32.gmra.mrb[0].mxu0 %v97
    %v189 = vpop.f32.mrb[0].mxu0
    %v190 = vadd.f32 %v80, %v189
    %v191 = vpop.f32.mrb[0].mxu0
    %v192 = vadd.f32 %v84, %v191
    %193 = vmatprep.mubr.f32.mxu0 0.0
    %194 = vmatmul.mubr.f32.gmra.mrb[0].mxu0 %v100
    %v195 = vpop.f32.mrb[0].mxu0
    %v196 = vadd.f32 %v80, %v195
    %v197 = vpop.f32.mrb[0].mxu0
    %v198 = vadd.f32 %v84, %v197
    %199 = vmatprep.mubr.f32.mxu0 0.0
    %200 = vmatmul.mubr.f32.gmra.mrb[0].mxu0 %v103
    %v201 = vpop.f32.mrb[0].mxu0
    %v202 = vadd.f32 %v80, %v201
    %v203 = vpop.f32.mrb[0].mxu0
    %v204 = vadd.f32 %v84, %v203
    %205 = vmatprep.mubr.f32.mxu0 0.0
    %206 = vmatmul.mubr.f32.gmra.mrb[0].mxu0 %v106
    %v207 = vpop.f32.mrb[0].mxu0
    %v208 = vadd.f32 %v80, %v207
    %v209 = vpop.f32.mrb[0].mxu0
    %v210 = vadd.f32 %v84, %v209
    %211 = vmatprep.mubr.f32.mxu0 0.0
    %212 = vmatmul.mubr.f32.gmra.mrb[0].mxu0 %v109
    %v213 = vpop.f32.mrb[0].mxu0
    %v214 = vadd.f32 %v80, %v213
    %v215 = vpop.f32.mrb[0].mxu0
    %v216 = vadd.f32 %v84, %v215
    %217 = vmatprep.mubr.f32.mxu0 0.0
    %218 = vmatmul.mubr.f32.gmra.mrb[0].mxu0 %v112
    %v219 = vpop.f32.mrb[0].mxu0
    %v220 = vadd.f32 %v80, %v219
    %v221 = vpop.f32.mrb[0].mxu0
    %v222 = vadd.f32 %v84, %v221
    %223 = vmatprep.mubr.f32.mxu0 0.0
    %224 = vmatmul.mubr.f32.gmra.mrb[0].mxu0 %v115
    %v225 = vpop.f32.mrb[0].mxu0
    %v226 = vadd.f32 %v80, %v225
    %v227 = vpop.f32.mrb[0].mxu0
    %v228 = vadd.f32 %v84, %v227
    %229 = vdwg.mxu0
    %230 = vmatprep.subr.mxu0 0.0
    %231 = vmatpush1.msra.mxu0 %v71
    %232 = vmatprep.subr.mxu0 0.0
    %233 = vmatpush1.msra.mxu0 %v74
    %234 = vmatprep.subr.mxu0 0.0
    %235 = vmatpush1.msra.mxu0 0.0
    %236 = vmatprep.subr.mxu0 0.0
    %237 = vmatpush1.msra.mxu0 0.0
    %238 = vmatprep.subr.mxu0 0.0
    %239 = vmatpush1.msra.mxu0 0.0
    %240 = vmatprep.subr.mxu0 0.0
    %241 = vmatpush1.msra.mxu0 0.0
    %242 = vmatprep.subr.mxu0 0.0
    %243 = vmatpush1.msra.mxu0 0.0
    %244 = vmatprep.subr.mxu0 0.0
    %245 = vmatpush1.msra.mxu0 0.0
    %246 = vmatprep.subr.mxu0 0.0
    %247 = vmatpush1.msra.mxu0 0.0
    %248 = vmatprep.subr.mxu0 0.0
    %249 = vmatpush1.msra.mxu0 0.0
    %250 = vmatprep.subr.mxu0 0.0
    %251 = vmatpush1.msra.mxu0 0.0
    %252 = vmatprep.subr.mxu0 0.0
    %253 = vmatpush1.msra.mxu0 0.0
    %254 = vmatprep.subr.mxu0 0.0
    %255 = vmatpush1.msra.mxu0 0.0
    %256 = vmatprep.subr.mxu0 0.0
    %257 = vmatpush1.msra.mxu0 0.0
    %258 = vmatprep.subr.mxu0 0.0
    %259 = vmatpush1.msra.mxu0 0.0
    %260 = vmatprep.subr.mxu0 0.0
    %261 = vmatpush1.msra.mxu0 0.0
    %262 = vmatprep.subr.mxu0 0.0
    %263 = vmatpush1.msra.mxu0 0.0
    %264 = vmatprep.subr.mxu0 0.0
    %265 = vmatpush1.msra.mxu0 0.0
    %266 = vmatprep.subr.mxu0 0.0
    %267 = vmatpush1.msra.mxu0 0.0
    %268 = vmatprep.subr.mxu0 0.0
    %269 = vmatpush1.msra.mxu0 0.0
    %270 = vmatprep.subr.mxu0 0.0
    %271 = vmatpush1.msra.mxu0 0.0
    %272 = vmatprep.subr.mxu0 0.0
    %273 = vmatpush1.msra.mxu0 0.0
    %274 = vmatprep.subr.mxu0 0.0
    %275 = vmatpush1.msra.mxu0 0.0
    %276 = vmatprep.subr.mxu0 0.0
    %277 = vmatpush1.msra.mxu0 0.0
    %278 = vmatprep.subr.mxu0 0.0
    %279 = vmatpush1.msra.mxu0 0.0
    %280 = vmatprep.subr.mxu0 0.0
    %281 = vmatpush1.msra.mxu0 0.0
    %282 = vmatprep.subr.mxu0 0.0
    %283 = vmatpush1.msra.mxu0 0.0
    %284 = vmatprep.subr.mxu0 0.0
    %285 = vmatpush1.msra.mxu0 0.0
    %286 = vmatprep.subr.mxu0 0.0
    %287 = vmatpush1.msra.mxu0 0.0
    %288 = vmatprep.subr.mxu0 0.0
    %289 = vmatpush1.msra.mxu0 0.0
    %290 = vmatprep.subr.mxu0 0.0
    %291 = vmatpush1.msra.mxu0 0.0
    %292 = vmatprep.subr.mxu0 0.0
    %293 = vmatpush1.msra.mxu0 0.0
    %294 = vmatprep.mubr.f32.mxu0 0.0
    %295 = vmatmul.mubr.f32.gmra.mrb[0].mxu0 %v94
    %v296 = vpop.f32.mrb[0].mxu0
    %v297 = vadd.f32 %v88, %v296
    %v298 = vpop.f32.mrb[0].mxu0
    %299 = vmatprep.mubr.f32.mxu0 0.0
    %300 = vmatmul.mubr.f32.gmra.mrb[0].mxu0 %v97
    %v301 = vpop.f32.mrb[0].mxu0
    %v302 = vadd.f32 %v88, %v301
    %v303 = vpop.f32.mrb[0].mxu0
    %304 = vmatprep.mubr.f32.mxu0 0.0
    %305 = vmatmul.mubr.f32.gmra.mrb[0].mxu0 %v100
    %v306 = vpop.f32.mrb[0].mxu0
    %v307 = vadd.f32 %v88, %v306
    %v308 = vpop.f32.mrb[0].mxu0
    %309 = vmatprep.mubr.f32.mxu0 0.0
    %310 = vmatmul.mubr.f32.gmra.mrb[0].mxu0 %v103
    %v311 = vpop.f32.mrb[0].mxu0
    %v312 = vadd.f32 %v88, %v311
    %v313 = vpop.f32.mrb[0].mxu0
    %314 = vmatprep.mubr.f32.mxu0 0.0
    %315 = vmatmul.mubr.f32.gmra.mrb[0].mxu0 %v106
    %v316 = vpop.f32.mrb[0].mxu0
    %v317 = vadd.f32 %v88, %v316
    %v318 = vpop.f32.mrb[0].mxu0
    %319 = vmatprep.mubr.f32.mxu0 0.0
    %320 = vmatmul.mubr.f32.gmra.mrb[0].mxu0 %v109
    %v321 = vpop.f32.mrb[0].mxu0
    %v322 = vadd.f32 %v88, %v321
    %v323 = vpop.f32.mrb[0].mxu0
    %324 = vmatprep.mubr.f32.mxu0 0.0
    %325 = vmatmul.mubr.f32.gmra.mrb[0].mxu0 %v112
    %v326 = vpop.f32.mrb[0].mxu0
    %v327 = vadd.f32 %v88, %v326
    %v328 = vpop.f32.mrb[0].mxu0
    %329 = vmatprep.mubr.f32.mxu0 0.0
    %330 = vmatmul.mubr.f32.gmra.mrb[0].mxu0 %v115
    %v331 = vpop.f32.mrb[0].mxu0
    %v332 = vadd.f32 %v88, %v331
    %v333 = vpop.f32.mrb[0].mxu0
    %334 = vdwg.mxu0
    %v335 = vld [vmem:[#allocation3] sm:$0xff]
    %v336 = vld [vmem:[#allocation3 + $0x8] sm:$0xff]
    %v337 = vld [vmem:[#allocation3 + $0x10] sm:$0xff]
    %v338 = vld [vmem:[#allocation3 + $0x18] sm:$0xff]
    %v339 = vld [vmem:[#allocation3 + $0x20] sm:$0xff]
    %v340 = vld [vmem:[#allocation3 + $0x28] sm:$0xff]
    %v341 = vld [vmem:[#allocation3 + $0x30] sm:$0xff]
    %v342 = vld [vmem:[#allocation3 + $0x38] sm:$0xff]
    %v343 = vld [vmem:[#allocation3 + $0x40] sm:$0xff]
    %v344 = vld [vmem:[#allocation3 + $0x48] sm:$0xff]
    %v345 = vld [vmem:[#allocation3 + $0x50] sm:$0xff]
    %v346 = vld [vmem:[#allocation3 + $0x58] sm:$0xff]
    %v347 = vld [vmem:[#allocation3 + $0x60] sm:$0xff]
    %v348 = vld [vmem:[#allocation3 + $0x68] sm:$0xff]
    %v349 = vld [vmem:[#allocation3 + $0x70] sm:$0xff]
    %v350 = vld [vmem:[#allocation3 + $0x78] sm:$0xff]
    %v351 = vld [vmem:[#allocation3 + $0x80] sm:$0xff]
    %v352 = vld [vmem:[#allocation3 + $0x88] sm:$0xff]
    %v353 = vld [vmem:[#allocation3 + $0x90] sm:$0xff]
    %v354 = vld [vmem:[#allocation3 + $0x98] sm:$0xff]
    %v355 = vld [vmem:[#allocation3 + $0xa0] sm:$0xff]
    %v356 = vld [vmem:[#allocation3 + $0xa8] sm:$0xff]
    %v357 = vld [vmem:[#allocation3 + $0xb0] sm:$0xff]
    %v358 = vld [vmem:[#allocation3 + $0xb8] sm:$0xff]
    %v359 = vld [vmem:[#allocation3 + $0xc0] sm:$0xff]
    %v360 = vld [vmem:[#allocation3 + $0xc8] sm:$0xff]
    %v361 = vld [vmem:[#allocation3 + $0xd0] sm:$0xff]
    %v362 = vld [vmem:[#allocation3 + $0xd8] sm:$0xff]
    %v363 = vld [vmem:[#allocation3 + $0xe0] sm:$0xff]
    %v364 = vld [vmem:[#allocation3 + $0xe8] sm:$0xff]
    %v365 = vld [vmem:[#allocation3 + $0xf0] sm:$0xff]
    %v366 = vld [vmem:[#allocation3 + $0xf8] sm:$0xff]
    %v367 = vld [vmem:[#allocation3 + $0x100] sm:$0xff]
    %v368 = vld [vmem:[#allocation3 + $0x108] sm:$0xff]
    %v369 = vld [vmem:[#allocation3 + $0x110] sm:$0xff]
    %v370 = vld [vmem:[#allocation3 + $0x118] sm:$0xff]
    %v371 = vld [vmem:[#allocation3 + $0x120] sm:$0xff]
    %v372 = vld [vmem:[#allocation3 + $0x128] sm:$0xff]
    %v373 = vld [vmem:[#allocation3 + $0x130] sm:$0xff]
    %v374 = vld [vmem:[#allocation3 + $0x138] sm:$0xff]
    %v375 = vld [vmem:[#allocation3 + $0x140] sm:$0xff]
    %v376 = vld [vmem:[#allocation3 + $0x148] sm:$0xff]
    %v377 = vld [vmem:[#allocation3 + $0x150] sm:$0xff]
    %v378 = vld [vmem:[#allocation3 + $0x158] sm:$0xff]
    %v379 = vld [vmem:[#allocation3 + $0x160] sm:$0xff]
    %v380 = vld [vmem:[#allocation3 + $0x168] sm:$0xff]
    %v381 = vld [vmem:[#allocation3 + $0x170] sm:$0xff]
    %v382 = vld [vmem:[#allocation3 + $0x178] sm:$0xff]
    %v383 = vld [vmem:[%s4] sm:$0x1]
    %v384 = vld [vmem:[%s5] sm:$0xff]
    %385 = vmatprep.subr.mxu0 %v336
    %386 = vmatpush1.msra.mxu0 %v335
    %387 = vmatprep.subr.mxu0 %v339
    %388 = vmatpush1.msra.mxu0 %v338
    %389 = vmatprep.subr.mxu0 %v342
    %390 = vmatpush1.msra.mxu0 %v341
    %391 = vmatprep.subr.mxu0 %v345
    %392 = vmatpush1.msra.mxu0 %v344
    %393 = vmatprep.subr.mxu0 %v348
    %394 = vmatpush1.msra.mxu0 %v347
    %395 = vmatprep.subr.mxu0 %v351
    %396 = vmatpush1.msra.mxu0 %v350
    %397 = vmatprep.subr.mxu0 %v354
    %398 = vmatpush1.msra.mxu0 %v353
    %399 = vmatprep.subr.mxu0 %v357
    %400 = vmatpush1.msra.mxu0 %v356
    %401 = vmatprep.subr.mxu0 %v360
    %402 = vmatpush1.msra.mxu0 %v359
    %403 = vmatprep.subr.mxu0 %v363
    %404 = vmatpush1.msra.mxu0 %v362
    %405 = vmatprep.subr.mxu0 %v366
    %406 = vmatpush1.msra.mxu0 %v365
    %407 = vmatprep.subr.mxu0 %v369
    %408 = vmatpush1.msra.mxu0 %v368
    %409 = vmatprep.subr.mxu0 %v372
    %410 = vmatpush1.msra.mxu0 %v371
    %411 = vmatprep.subr.mxu0 %v375
    %412 = vmatpush1.msra.mxu0 %v374
    %413 = vmatprep.subr.mxu0 %v378
    %414 = vmatpush1.msra.mxu0 %v377
    %415 = vmatprep.subr.mxu0 %v381
    %416 = vmatpush1.msra.mxu0 %v380
    %417 = vmatprep.subr.mxu0 0.0
    %418 = vmatpush1.msra.mxu0 0.0
    %419 = vmatprep.subr.mxu0 0.0
    %420 = vmatpush1.msra.mxu0 0.0
    %421 = vmatprep.subr.mxu0 0.0
    %422 = vmatpush1.msra.mxu0 0.0
    %423 = vmatprep.subr.mxu0 0.0
    %424 = vmatpush1.msra.mxu0 0.0
    %425 = vmatprep.subr.mxu0 0.0
    %426 = vmatpush1.msra.mxu0 0.0
    %427 = vmatprep.subr.mxu0 0.0
    %428 = vmatpush1.msra.mxu0 0.0
    %429 = vmatprep.subr.mxu0 0.0
    %430 = vmatpush1.msra.mxu0 0.0
    %431 = vmatprep.subr.mxu0 0.0
    %432 = vmatpush1.msra.mxu0 0.0
    %433 = vmatprep.subr.mxu0 0.0
    %434 = vmatpush1.msra.mxu0 0.0
    %435 = vmatprep.subr.mxu0 0.0
    %436 = vmatpush1.msra.mxu0 0.0
    %437 = vmatprep.subr.mxu0 0.0
    %438 = vmatpush1.msra.mxu0 0.0
    %439 = vmatprep.subr.mxu0 0.0
    %440 = vmatpush1.msra.mxu0 0.0
    %441 = vmatprep.subr.mxu0 0.0
    %442 = vmatpush1.msra.mxu0 0.0
    %443 = vmatprep.subr.mxu0 0.0
    %444 = vmatpush1.msra.mxu0 0.0
    %445 = vmatprep.subr.mxu0 0.0
    %446 = vmatpush1.msra.mxu0 0.0
    %447 = vmatprep.subr.mxu0 0.0
    %448 = vmatpush1.msra.mxu0 0.0
    %449 = vmatprep.mubr.f32.mxu0 0.0
    %450 = vmatmul.mubr.f32.gmra.mrb[0].mxu0 %v384
    %v451 = vpop.f32.mrb[0].mxu0
    %v452 = vadd.f32 0.0, %v451
    %v453 = vpop.f32.mrb[0].mxu0
    %v454 = vadd.f32 0.0, %v453
    %455 = vdwg.mxu0
    %456 = vmatprep.subr.mxu0 0.0
    %457 = vmatpush1.msra.mxu0 %v337
    %458 = vmatprep.subr.mxu0 0.0
    %459 = vmatpush1.msra.mxu0 %v340
    %460 = vmatprep.subr.mxu0 0.0
    %461 = vmatpush1.msra.mxu0 %v343
    %462 = vmatprep.subr.mxu0 0.0
    %463 = vmatpush1.msra.mxu0 %v346
    %464 = vmatprep.subr.mxu0 0.0
    %465 = vmatpush1.msra.mxu0 %v349
    %466 = vmatprep.subr.mxu0 0.0
    %467 = vmatpush1.msra.mxu0 %v352
    %468 = vmatprep.subr.mxu0 0.0
    %469 = vmatpush1.msra.mxu0 %v355
    %470 = vmatprep.subr.mxu0 0.0
    %471 = vmatpush1.msra.mxu0 %v358
    %472 = vmatprep.subr.mxu0 0.0
    %473 = vmatpush1.msra.mxu0 %v361
    %474 = vmatprep.subr.mxu0 0.0
    %475 = vmatpush1.msra.mxu0 %v364
    %476 = vmatprep.subr.mxu0 0.0
    %477 = vmatpush1.msra.mxu0 %v367
    %478 = vmatprep.subr.mxu0 0.0
    %479 = vmatpush1.msra.mxu0 %v370
    %480 = vmatprep.subr.mxu0 0.0
    %481 = vmatpush1.msra.mxu0 %v373
    %482 = vmatprep.subr.mxu0 0.0
    %483 = vmatpush1.msra.mxu0 %v376
    %484 = vmatprep.subr.mxu0 0.0
    %485 = vmatpush1.msra.mxu0 %v379
    %486 = vmatprep.subr.mxu0 0.0
    %487 = vmatpush1.msra.mxu0 %v382
    %488 = vmatprep.subr.mxu0 0.0
    %489 = vmatpush1.msra.mxu0 0.0
    %490 = vmatprep.subr.mxu0 0.0
    %491 = vmatpush1.msra.mxu0 0.0
    %492 = vmatprep.subr.mxu0 0.0
    %493 = vmatpush1.msra.mxu0 0.0
    %494 = vmatprep.subr.mxu0 0.0
    %495 = vmatpush1.msra.mxu0 0.0
    %496 = vmatprep.subr.mxu0 0.0
    %497 = vmatpush1.msra.mxu0 0.0
    %498 = vmatprep.subr.mxu0 0.0
    %499 = vmatpush1.msra.mxu0 0.0
    %500 = vmatprep.subr.mxu0 0.0
    %501 = vmatpush1.msra.mxu0 0.0
    %502 = vmatprep.subr.mxu0 0.0
    %503 = vmatpush1.msra.mxu0 0.0
    %504 = vmatprep.subr.mxu0 0.0
    %505 = vmatpush1.msra.mxu0 0.0
    %506 = vmatprep.subr.mxu0 0.0
    %507 = vmatpush1.msra.mxu0 0.0
    %508 = vmatprep.subr.mxu0 0.0
    %509 = vmatpush1.msra.mxu0 0.0
    %510 = vmatprep.subr.mxu0 0.0
    %511 = vmatpush1.msra.mxu0 0.0
    %512 = vmatprep.subr.mxu0 0.0
    %513 = vmatpush1.msra.mxu0 0.0
    %514 = vmatprep.subr.mxu0 0.0
    %515 = vmatpush1.msra.mxu0 0.0
    %516 = vmatprep.subr.mxu0 0.0
    %517 = vmatpush1.msra.mxu0 0.0
    %518 = vmatprep.subr.mxu0 0.0
    %519 = vmatpush1.msra.mxu0 0.0
    %520 = vmatprep.mubr.f32.mxu0 0.0
    %521 = vmatmul.mubr.f32.gmra.mrb[0].mxu0 %v384
    %v522 = vpop.f32.mrb[0].mxu0
    %v523 = vadd.f32 0.0, %v522
    %v524 = vpop.f32.mrb[0].mxu0
    %525 = vdwg.mxu0
    %v526 = vadd.f32 %v184, %v452
    %v527 = vadd.f32 %v186, %v454
    %v528 = vxor.u32 %v526, 2147483648
    %v529 = vxor.u32 %v527, 2147483648
    %v530 = vmul.f32 %v528, 1.442695
    %v531 = vpow.pop %v530
    %v532 = vmul.f32 %v529, 1.442695
    %v533 = vpow.pop %v532
    %v534 = vadd.f32 %v531, 1.0
    %v535 = vadd.f32 %v533, 1.0
    %v536 = vrcp.pop %v534
    %v537 = vmul.f32 1.0, %v536
    %v538 = vrcp.pop %v535
    %v539 = vmul.f32 1.0, %v538
    %v541 = vlaneseq
    %v542 = vshrl.u32 %v541, 7
    %v543 = vsub.s32 0, %v542
    %v544 = vrot.slane %v383, %v543
    %v546 = vadd.f32 %v523, %v544
    %v547 = vmul.f32 %v537, %v546
    %v548 = vadd.f32 %v297, %v547
    %v549 = vtanh.pop %v548
    %v550 = vsub.f32 1.0, %v539
    %v551 = vmul.f32 %v550, %v549
    %v552 = vmul.f32 %v539, %v384
    %v553 = vadd.f32 %v551, %v552
    %554 = vst [vmem:[#allocation2] sm:$0xff] %v553
    %555 = vmatprep.subr.mxu0 %v336
    %556 = vmatpush1.msra.mxu0 %v335
    %557 = vmatprep.subr.mxu0 %v339
    %558 = vmatpush1.msra.mxu0 %v338
    %559 = vmatprep.subr.mxu0 %v342
    %560 = vmatpush1.msra.mxu0 %v341
    %561 = vmatprep.subr.mxu0 %v345
    %562 = vmatpush1.msra.mxu0 %v344
    %563 = vmatprep.subr.mxu0 %v348
    %564 = vmatpush1.msra.mxu0 %v347
    %565 = vmatprep.subr.mxu0 %v351
    %566 = vmatpush1.msra.mxu0 %v350
    %567 = vmatprep.subr.mxu0 %v354
    %568 = vmatpush1.msra.mxu0 %v353
    %569 = vmatprep.subr.mxu0 %v357
    %570 = vmatpush1.msra.mxu0 %v356
    %571 = vmatprep.subr.mxu0 %v360
    %572 = vmatpush1.msra.mxu0 %v359
    %573 = vmatprep.subr.mxu0 %v363
    %574 = vmatpush1.msra.mxu0 %v362
    %575 = vmatprep.subr.mxu0 %v366
    %576 = vmatpush1.msra.mxu0 %v365
    %577 = vmatprep.subr.mxu0 %v369
    %578 = vmatpush1.msra.mxu0 %v368
    %579 = vmatprep.subr.mxu0 %v372
    %580 = vmatpush1.msra.mxu0 %v371
    %581 = vmatprep.subr.mxu0 %v375
    %582 = vmatpush1.msra.mxu0 %v374
    %583 = vmatprep.subr.mxu0 %v378
    %584 = vmatpush1.msra.mxu0 %v377
    %585 = vmatprep.subr.mxu0 %v381
    %586 = vmatpush1.msra.mxu0 %v380
    %587 = vmatprep.subr.mxu0 0.0
    %588 = vmatpush1.msra.mxu0 0.0
    %589 = vmatprep.subr.mxu0 0.0
    %590 = vmatpush1.msra.mxu0 0.0
    %591 = vmatprep.subr.mxu0 0.0
    %592 = vmatpush1.msra.mxu0 0.0
    %593 = vmatprep.subr.mxu0 0.0
    %594 = vmatpush1.msra.mxu0 0.0
    %595 = vmatprep.subr.mxu0 0.0
    %596 = vmatpush1.msra.mxu0 0.0
    %597 = vmatprep.subr.mxu0 0.0
    %598 = vmatpush1.msra.mxu0 0.0
    %599 = vmatprep.subr.mxu0 0.0
    %600 = vmatpush1.msra.mxu0 0.0
    %601 = vmatprep.subr.mxu0 0.0
    %602 = vmatpush1.msra.mxu0 0.0
    %603 = vmatprep.subr.mxu0 0.0
    %604 = vmatpush1.msra.mxu0 0.0
    %605 = vmatprep.subr.mxu0 0.0
    %606 = vmatpush1.msra.mxu0 0.0
    %607 = vmatprep.subr.mxu0 0.0
    %608 = vmatpush1.msra.mxu0 0.0
    %609 = vmatprep.subr.mxu0 0.0
    %610 = vmatpush1.msra.mxu0 0.0
    %611 = vmatprep.subr.mxu0 0.0
    %612 = vmatpush1.msra.mxu0 0.0
    %613 = vmatprep.subr.mxu0 0.0
    %614 = vmatpush1.msra.mxu0 0.0
    %615 = vmatprep.subr.mxu0 0.0
    %616 = vmatpush1.msra.mxu0 0.0
    %617 = vmatprep.subr.mxu0 0.0
    %618 = vmatpush1.msra.mxu0 0.0
    %619 = vmatprep.mubr.f32.mxu0 0.0
    %620 = vmatmul.mubr.f32.gmra.mrb[0].mxu0 %v553
    %v621 = vpop.f32.mrb[0].mxu0
    %v622 = vadd.f32 0.0, %v621
    %v623 = vpop.f32.mrb[0].mxu0
    %v624 = vadd.f32 0.0, %v623
    %625 = vdwg.mxu0
    %626 = vmatprep.subr.mxu0 0.0
    %627 = vmatpush1.msra.mxu0 %v337
    %628 = vmatprep.subr.mxu0 0.0
    %629 = vmatpush1.msra.mxu0 %v340
    %630 = vmatprep.subr.mxu0 0.0
    %631 = vmatpush1.msra.mxu0 %v343
    %632 = vmatprep.subr.mxu0 0.0
    %633 = vmatpush1.msra.mxu0 %v346
    %634 = vmatprep.subr.mxu0 0.0
    %635 = vmatpush1.msra.mxu0 %v349
    %636 = vmatprep.subr.mxu0 0.0
    %637 = vmatpush1.msra.mxu0 %v352
    %638 = vmatprep.subr.mxu0 0.0
    %639 = vmatpush1.msra.mxu0 %v355
    %640 = vmatprep.subr.mxu0 0.0
    %641 = vmatpush1.msra.mxu0 %v358
    %642 = vmatprep.subr.mxu0 0.0
    %643 = vmatpush1.msra.mxu0 %v361
    %644 = vmatprep.subr.mxu0 0.0
    %645 = vmatpush1.msra.mxu0 %v364
    %646 = vmatprep.subr.mxu0 0.0
    %647 = vmatpush1.msra.mxu0 %v367
    %648 = vmatprep.subr.mxu0 0.0
    %649 = vmatpush1.msra.mxu0 %v370
    %650 = vmatprep.subr.mxu0 0.0
    %651 = vmatpush1.msra.mxu0 %v373
    %652 = vmatprep.subr.mxu0 0.0
    %653 = vmatpush1.msra.mxu0 %v376
    %654 = vmatprep.subr.mxu0 0.0
    %655 = vmatpush1.msra.mxu0 %v379
    %656 = vmatprep.subr.mxu0 0.0
    %657 = vmatpush1.msra.mxu0 %v382
    %658 = vmatprep.subr.mxu0 0.0
    %659 = vmatpush1.msra.mxu0 0.0
    %660 = vmatprep.subr.mxu0 0.0
    %661 = vmatpush1.msra.mxu0 0.0
    %662 = vmatprep.subr.mxu0 0.0
    %663 = vmatpush1.msra.mxu0 0.0
    %664 = vmatprep.subr.mxu0 0.0
    %665 = vmatpush1.msra.mxu0 0.0
    %666 = vmatprep.subr.mxu0 0.0
    %667 = vmatpush1.msra.mxu0 0.0
    %668 = vmatprep.subr.mxu0 0.0
    %669 = vmatpush1.msra.mxu0 0.0
    %670 = vmatprep.subr.mxu0 0.0
    %671 = vmatpush1.msra.mxu0 0.0
    %672 = vmatprep.subr.mxu0 0.0
    %673 = vmatpush1.msra.mxu0 0.0
    %674 = vmatprep.subr.mxu0 0.0
    %675 = vmatpush1.msra.mxu0 0.0
    %676 = vmatprep.subr.mxu0 0.0
    %677 = vmatpush1.msra.mxu0 0.0
    %678 = vmatprep.subr.mxu0 0.0
    %679 = vmatpush1.msra.mxu0 0.0
    %680 = vmatprep.subr.mxu0 0.0
    %681 = vmatpush1.msra.mxu0 0.0
    %682 = vmatprep.subr.mxu0 0.0
    %683 = vmatpush1.msra.mxu0 0.0
    %684 = vmatprep.subr.mxu0 0.0
    %685 = vmatpush1.msra.mxu0 0.0
    %686 = vmatprep.subr.mxu0 0.0
    %687 = vmatpush1.msra.mxu0 0.0
    %688 = vmatprep.subr.mxu0 0.0
    %689 = vmatpush1.msra.mxu0 0.0
    %690 = vmatprep.mubr.f32.mxu0 0.0
    %691 = vmatmul.mubr.f32.gmra.mrb[0].mxu0 %v553
    %v692 = vpop.f32.mrb[0].mxu0
    %v693 = vadd.f32 0.0, %v692
    %v694 = vpop.f32.mrb[0].mxu0
    %695 = vdwg.mxu0
    %v696 = vadd.f32 %v190, %v622
    %v697 = vadd.f32 %v192, %v624
    %v698 = vxor.u32 %v696, 2147483648
    %v699 = vxor.u32 %v697, 2147483648
    %v700 = vmul.f32 %v698, 1.442695
    %v701 = vpow.pop %v700
    %v702 = vmul.f32 %v699, 1.442695
    %v703 = vpow.pop %v702
    %v704 = vadd.f32 %v701, 1.0
    %v705 = vadd.f32 %v703, 1.0
    %v706 = vrcp.pop %v704
    %v707 = vmul.f32 1.0, %v706
    %v708 = vrcp.pop %v705
    %v709 = vmul.f32 1.0, %v708
    %v710 = vadd.f32 %v693, %v544
    %v711 = vmul.f32 %v707, %v710
    %v712 = vadd.f32 %v302, %v711
    %v713 = vtanh.pop %v712
    %v714 = vsub.f32 1.0, %v709
    %v715 = vmul.f32 %v714, %v713
    %v716 = vmul.f32 %v709, %v553
    %v717 = vadd.f32 %v715, %v716
    %718 = vst [vmem:[#allocation2 + $0x8] sm:$0xff] %v717
    %719 = vmatprep.subr.mxu0 %v336
    %720 = vmatpush1.msra.mxu0 %v335
    %721 = vmatprep.subr.mxu0 %v339
    %722 = vmatpush1.msra.mxu0 %v338
    %723 = vmatprep.subr.mxu0 %v342
    %724 = vmatpush1.msra.mxu0 %v341
    %725 = vmatprep.subr.mxu0 %v345
    %726 = vmatpush1.msra.mxu0 %v344
    %727 = vmatprep.subr.mxu0 %v348
    %728 = vmatpush1.msra.mxu0 %v347
    %729 = vmatprep.subr.mxu0 %v351
    %730 = vmatpush1.msra.mxu0 %v350
    %731 = vmatprep.subr.mxu0 %v354
    %732 = vmatpush1.msra.mxu0 %v353
    %733 = vmatprep.subr.mxu0 %v357
    %734 = vmatpush1.msra.mxu0 %v356
    %735 = vmatprep.subr.mxu0 %v360
    %736 = vmatpush1.msra.mxu0 %v359
    %737 = vmatprep.subr.mxu0 %v363
    %738 = vmatpush1.msra.mxu0 %v362
    %739 = vmatprep.subr.mxu0 %v366
    %740 = vmatpush1.msra.mxu0 %v365
    %741 = vmatprep.subr.mxu0 %v369
    %742 = vmatpush1.msra.mxu0 %v368
    %743 = vmatprep.subr.mxu0 %v372
    %744 = vmatpush1.msra.mxu0 %v371
    %745 = vmatprep.subr.mxu0 %v375
    %746 = vmatpush1.msra.mxu0 %v374
    %747 = vmatprep.subr.mxu0 %v378
    %748 = vmatpush1.msra.mxu0 %v377
    %749 = vmatprep.subr.mxu0 %v381
    %750 = vmatpush1.msra.mxu0 %v380
    %751 = vmatprep.subr.mxu0 0.0
    %752 = vmatpush1.msra.mxu0 0.0
    %753 = vmatprep.subr.mxu0 0.0
    %754 = vmatpush1.msra.mxu0 0.0
    %755 = vmatprep.subr.mxu0 0.0
    %756 = vmatpush1.msra.mxu0 0.0
    %757 = vmatprep.subr.mxu0 0.0
    %758 = vmatpush1.msra.mxu0 0.0
    %759 = vmatprep.subr.mxu0 0.0
    %760 = vmatpush1.msra.mxu0 0.0
    %761 = vmatprep.subr.mxu0 0.0
    %762 = vmatpush1.msra.mxu0 0.0
    %763 = vmatprep.subr.mxu0 0.0
    %764 = vmatpush1.msra.mxu0 0.0
    %765 = vmatprep.subr.mxu0 0.0
    %766 = vmatpush1.msra.mxu0 0.0
    %767 = vmatprep.subr.mxu0 0.0
    %768 = vmatpush1.msra.mxu0 0.0
    %769 = vmatprep.subr.mxu0 0.0
    %770 = vmatpush1.msra.mxu0 0.0
    %771 = vmatprep.subr.mxu0 0.0
    %772 = vmatpush1.msra.mxu0 0.0
    %773 = vmatprep.subr.mxu0 0.0
    %774 = vmatpush1.msra.mxu0 0.0
    %775 = vmatprep.subr.mxu0 0.0
    %776 = vmatpush1.msra.mxu0 0.0
    %777 = vmatprep.subr.mxu0 0.0
    %778 = vmatpush1.msra.mxu0 0.0
    %779 = vmatprep.subr.mxu0 0.0
    %780 = vmatpush1.msra.mxu0 0.0
    %781 = vmatprep.subr.mxu0 0.0
    %782 = vmatpush1.msra.mxu0 0.0
    %783 = vmatprep.mubr.f32.mxu0 0.0
    %784 = vmatmul.mubr.f32.gmra.mrb[0].mxu0 %v717
    %v785 = vpop.f32.mrb[0].mxu0
    %v786 = vadd.f32 0.0, %v785
    %v787 = vpop.f32.mrb[0].mxu0
    %v788 = vadd.f32 0.0, %v787
    %789 = vdwg.mxu0
    %790 = vmatprep.subr.mxu0 0.0
    %791 = vmatpush1.msra.mxu0 %v337
    %792 = vmatprep.subr.mxu0 0.0
    %793 = vmatpush1.msra.mxu0 %v340
    %794 = vmatprep.subr.mxu0 0.0
    %795 = vmatpush1.msra.mxu0 %v343
    %796 = vmatprep.subr.mxu0 0.0
    %797 = vmatpush1.msra.mxu0 %v346
    %798 = vmatprep.subr.mxu0 0.0
    %799 = vmatpush1.msra.mxu0 %v349
    %800 = vmatprep.subr.mxu0 0.0
    %801 = vmatpush1.msra.mxu0 %v352
    %802 = vmatprep.subr.mxu0 0.0
    %803 = vmatpush1.msra.mxu0 %v355
    %804 = vmatprep.subr.mxu0 0.0
    %805 = vmatpush1.msra.mxu0 %v358
    %806 = vmatprep.subr.mxu0 0.0
    %807 = vmatpush1.msra.mxu0 %v361
    %808 = vmatprep.subr.mxu0 0.0
    %809 = vmatpush1.msra.mxu0 %v364
    %810 = vmatprep.subr.mxu0 0.0
    %811 = vmatpush1.msra.mxu0 %v367
    %812 = vmatprep.subr.mxu0 0.0
    %813 = vmatpush1.msra.mxu0 %v370
    %814 = vmatprep.subr.mxu0 0.0
    %815 = vmatpush1.msra.mxu0 %v373
    %816 = vmatprep.subr.mxu0 0.0
    %817 = vmatpush1.msra.mxu0 %v376
    %818 = vmatprep.subr.mxu0 0.0
    %819 = vmatpush1.msra.mxu0 %v379
    %820 = vmatprep.subr.mxu0 0.0
    %821 = vmatpush1.msra.mxu0 %v382
    %822 = vmatprep.subr.mxu0 0.0
    %823 = vmatpush1.msra.mxu0 0.0
    %824 = vmatprep.subr.mxu0 0.0
    %825 = vmatpush1.msra.mxu0 0.0
    %826 = vmatprep.subr.mxu0 0.0
    %827 = vmatpush1.msra.mxu0 0.0
    %828 = vmatprep.subr.mxu0 0.0
    %829 = vmatpush1.msra.mxu0 0.0
    %830 = vmatprep.subr.mxu0 0.0
    %831 = vmatpush1.msra.mxu0 0.0
    %832 = vmatprep.subr.mxu0 0.0
    %833 = vmatpush1.msra.mxu0 0.0
    %834 = vmatprep.subr.mxu0 0.0
    %835 = vmatpush1.msra.mxu0 0.0
    %836 = vmatprep.subr.mxu0 0.0
    %837 = vmatpush1.msra.mxu0 0.0
    %838 = vmatprep.subr.mxu0 0.0
    %839 = vmatpush1.msra.mxu0 0.0
    %840 = vmatprep.subr.mxu0 0.0
    %841 = vmatpush1.msra.mxu0 0.0
    %842 = vmatprep.subr.mxu0 0.0
    %843 = vmatpush1.msra.mxu0 0.0
    %844 = vmatprep.subr.mxu0 0.0
    %845 = vmatpush1.msra.mxu0 0.0
    %846 = vmatprep.subr.mxu0 0.0
    %847 = vmatpush1.msra.mxu0 0.0
    %848 = vmatprep.subr.mxu0 0.0
    %849 = vmatpush1.msra.mxu0 0.0
    %850 = vmatprep.subr.mxu0 0.0
    %851 = vmatpush1.msra.mxu0 0.0
    %852 = vmatprep.subr.mxu0 0.0
    %853 = vmatpush1.msra.mxu0 0.0
    %854 = vmatprep.mubr.f32.mxu0 0.0
    %855 = vmatmul.mubr.f32.gmra.mrb[0].mxu0 %v717
    %v856 = vpop.f32.mrb[0].mxu0
    %v857 = vadd.f32 0.0, %v856
    %v858 = vpop.f32.mrb[0].mxu0
    %859 = vdwg.mxu0
    %v860 = vadd.f32 %v196, %v786
    %v861 = vadd.f32 %v198, %v788
    %v862 = vxor.u32 %v860, 2147483648
    %v863 = vxor.u32 %v861, 2147483648
    %v864 = vmul.f32 %v862, 1.442695
    %v865 = vpow.pop %v864
    %v866 = vmul.f32 %v863, 1.442695
    %v867 = vpow.pop %v866
    %v868 = vadd.f32 %v865, 1.0
    %v869 = vadd.f32 %v867, 1.0
    %v870 = vrcp.pop %v868
    %v871 = vmul.f32 1.0, %v870
    %v872 = vrcp.pop %v869
    %v873 = vmul.f32 1.0, %v872
    %v874 = vadd.f32 %v857, %v544
    %v875 = vmul.f32 %v871, %v874
    %v876 = vadd.f32 %v307, %v875
    %v877 = vtanh.pop %v876
    %v878 = vsub.f32 1.0, %v873
    %v879 = vmul.f32 %v878, %v877
    %v880 = vmul.f32 %v873, %v717
    %v881 = vadd.f32 %v879, %v880
    %882 = vst [vmem:[#allocation2 + $0x10] sm:$0xff] %v881
    %883 = vmatprep.subr.mxu0 %v336
    %884 = vmatpush1.msra.mxu0 %v335
    %885 = vmatprep.subr.mxu0 %v339
    %886 = vmatpush1.msra.mxu0 %v338
    %887 = vmatprep.subr.mxu0 %v342
    %888 = vmatpush1.msra.mxu0 %v341
    %889 = vmatprep.subr.mxu0 %v345
    %890 = vmatpush1.msra.mxu0 %v344
    %891 = vmatprep.subr.mxu0 %v348
    %892 = vmatpush1.msra.mxu0 %v347
    %893 = vmatprep.subr.mxu0 %v351
    %894 = vmatpush1.msra.mxu0 %v350
    %895 = vmatprep.subr.mxu0 %v354
    %896 = vmatpush1.msra.mxu0 %v353
    %897 = vmatprep.subr.mxu0 %v357
    %898 = vmatpush1.msra.mxu0 %v356
    %899 = vmatprep.subr.mxu0 %v360
    %900 = vmatpush1.msra.mxu0 %v359
    %901 = vmatprep.subr.mxu0 %v363
    %902 = vmatpush1.msra.mxu0 %v362
    %903 = vmatprep.subr.mxu0 %v366
    %904 = vmatpush1.msra.mxu0 %v365
    %905 = vmatprep.subr.mxu0 %v369
    %906 = vmatpush1.msra.mxu0 %v368
    %907 = vmatprep.subr.mxu0 %v372
    %908 = vmatpush1.msra.mxu0 %v371
    %909 = vmatprep.subr.mxu0 %v375
    %910 = vmatpush1.msra.mxu0 %v374
    %911 = vmatprep.subr.mxu0 %v378
    %912 = vmatpush1.msra.mxu0 %v377
    %913 = vmatprep.subr.mxu0 %v381
    %914 = vmatpush1.msra.mxu0 %v380
    %915 = vmatprep.subr.mxu0 0.0
    %916 = vmatpush1.msra.mxu0 0.0
    %917 = vmatprep.subr.mxu0 0.0
    %918 = vmatpush1.msra.mxu0 0.0
    %919 = vmatprep.subr.mxu0 0.0
    %920 = vmatpush1.msra.mxu0 0.0
    %921 = vmatprep.subr.mxu0 0.0
    %922 = vmatpush1.msra.mxu0 0.0
    %923 = vmatprep.subr.mxu0 0.0
    %924 = vmatpush1.msra.mxu0 0.0
    %925 = vmatprep.subr.mxu0 0.0
    %926 = vmatpush1.msra.mxu0 0.0
    %927 = vmatprep.subr.mxu0 0.0
    %928 = vmatpush1.msra.mxu0 0.0
    %929 = vmatprep.subr.mxu0 0.0
    %930 = vmatpush1.msra.mxu0 0.0
    %931 = vmatprep.subr.mxu0 0.0
    %932 = vmatpush1.msra.mxu0 0.0
    %933 = vmatprep.subr.mxu0 0.0
    %934 = vmatpush1.msra.mxu0 0.0
    %935 = vmatprep.subr.mxu0 0.0
    %936 = vmatpush1.msra.mxu0 0.0
    %937 = vmatprep.subr.mxu0 0.0
    %938 = vmatpush1.msra.mxu0 0.0
    %939 = vmatprep.subr.mxu0 0.0
    %940 = vmatpush1.msra.mxu0 0.0
    %941 = vmatprep.subr.mxu0 0.0
    %942 = vmatpush1.msra.mxu0 0.0
    %943 = vmatprep.subr.mxu0 0.0
    %944 = vmatpush1.msra.mxu0 0.0
    %945 = vmatprep.subr.mxu0 0.0
    %946 = vmatpush1.msra.mxu0 0.0
    %947 = vmatprep.mubr.f32.mxu0 0.0
    %948 = vmatmul.mubr.f32.gmra.mrb[0].mxu0 %v881
    %v949 = vpop.f32.mrb[0].mxu0
    %v950 = vadd.f32 0.0, %v949
    %v951 = vpop.f32.mrb[0].mxu0
    %v952 = vadd.f32 0.0, %v951
    %953 = vdwg.mxu0
    %954 = vmatprep.subr.mxu0 0.0
    %955 = vmatpush1.msra.mxu0 %v337
    %956 = vmatprep.subr.mxu0 0.0
    %957 = vmatpush1.msra.mxu0 %v340
    %958 = vmatprep.subr.mxu0 0.0
    %959 = vmatpush1.msra.mxu0 %v343
    %960 = vmatprep.subr.mxu0 0.0
    %961 = vmatpush1.msra.mxu0 %v346
    %962 = vmatprep.subr.mxu0 0.0
    %963 = vmatpush1.msra.mxu0 %v349
    %964 = vmatprep.subr.mxu0 0.0
    %965 = vmatpush1.msra.mxu0 %v352
    %966 = vmatprep.subr.mxu0 0.0
    %967 = vmatpush1.msra.mxu0 %v355
    %968 = vmatprep.subr.mxu0 0.0
    %969 = vmatpush1.msra.mxu0 %v358
    %970 = vmatprep.subr.mxu0 0.0
    %971 = vmatpush1.msra.mxu0 %v361
    %972 = vmatprep.subr.mxu0 0.0
    %973 = vmatpush1.msra.mxu0 %v364
    %974 = vmatprep.subr.mxu0 0.0
    %975 = vmatpush1.msra.mxu0 %v367
    %976 = vmatprep.subr.mxu0 0.0
    %977 = vmatpush1.msra.mxu0 %v370
    %978 = vmatprep.subr.mxu0 0.0
    %979 = vmatpush1.msra.mxu0 %v373
    %980 = vmatprep.subr.mxu0 0.0
    %981 = vmatpush1.msra.mxu0 %v376
    %982 = vmatprep.subr.mxu0 0.0
    %983 = vmatpush1.msra.mxu0 %v379
    %984 = vmatprep.subr.mxu0 0.0
    %985 = vmatpush1.msra.mxu0 %v382
    %986 = vmatprep.subr.mxu0 0.0
    %987 = vmatpush1.msra.mxu0 0.0
    %988 = vmatprep.subr.mxu0 0.0
    %989 = vmatpush1.msra.mxu0 0.0
    %990 = vmatprep.subr.mxu0 0.0
    %991 = vmatpush1.msra.mxu0 0.0
    %992 = vmatprep.subr.mxu0 0.0
    %993 = vmatpush1.msra.mxu0 0.0
    %994 = vmatprep.subr.mxu0 0.0
    %995 = vmatpush1.msra.mxu0 0.0
    %996 = vmatprep.subr.mxu0 0.0
    %997 = vmatpush1.msra.mxu0 0.0
    %998 = vmatprep.subr.mxu0 0.0
    %999 = vmatpush1.msra.mxu0 0.0
    %1000 = vmatprep.subr.mxu0 0.0
    %1001 = vmatpush1.msra.mxu0 0.0
    %1002 = vmatprep.subr.mxu0 0.0
    %1003 = vmatpush1.msra.mxu0 0.0
    %1004 = vmatprep.subr.mxu0 0.0
    %1005 = vmatpush1.msra.mxu0 0.0
    %1006 = vmatprep.subr.mxu0 0.0
    %1007 = vmatpush1.msra.mxu0 0.0
    %1008 = vmatprep.subr.mxu0 0.0
    %1009 = vmatpush1.msra.mxu0 0.0
    %1010 = vmatprep.subr.mxu0 0.0
    %1011 = vmatpush1.msra.mxu0 0.0
    %1012 = vmatprep.subr.mxu0 0.0
    %1013 = vmatpush1.msra.mxu0 0.0
    %1014 = vmatprep.subr.mxu0 0.0
    %1015 = vmatpush1.msra.mxu0 0.0
    %1016 = vmatprep.subr.mxu0 0.0
    %1017 = vmatpush1.msra.mxu0 0.0
    %1018 = vmatprep.mubr.f32.mxu0 0.0
    %1019 = vmatmul.mubr.f32.gmra.mrb[0].mxu0 %v881
    %v1020 = vpop.f32.mrb[0].mxu0
    %v1021 = vadd.f32 0.0, %v1020
    %v1022 = vpop.f32.mrb[0].mxu0
    %1023 = vdwg.mxu0
    %v1024 = vadd.f32 %v202, %v950
    %v1025 = vadd.f32 %v204, %v952
    %v1026 = vxor.u32 %v1024, 2147483648
    %v1027 = vxor.u32 %v1025, 2147483648
    %v1028 = vmul.f32 %v1026, 1.442695
    %v1029 = vpow.pop %v1028
    %v1030 = vmul.f32 %v1027, 1.442695
    %v1031 = vpow.pop %v1030
    %v1032 = vadd.f32 %v1029, 1.0
    %v1033 = vadd.f32 %v1031, 1.0
    %v1034 = vrcp.pop %v1032
    %v1035 = vmul.f32 1.0, %v1034
    %v1036 = vrcp.pop %v1033
    %v1037 = vmul.f32 1.0, %v1036
    %v1038 = vadd.f32 %v1021, %v544
    %v1039 = vmul.f32 %v1035, %v1038
    %v1040 = vadd.f32 %v312, %v1039
    %v1041 = vtanh.pop %v1040
    %v1042 = vsub.f32 1.0, %v1037
    %v1043 = vmul.f32 %v1042, %v1041
    %v1044 = vmul.f32 %v1037, %v881
    %v1045 = vadd.f32 %v1043, %v1044
    %1046 = vst [vmem:[#allocation2 + $0x18] sm:$0xff] %v1045
    %1047 = vmatprep.subr.mxu0 %v336
    %1048 = vmatpush1.msra.mxu0 %v335
    %1049 = vmatprep.subr.mxu0 %v339
    %1050 = vmatpush1.msra.mxu0 %v338
    %1051 = vmatprep.subr.mxu0 %v342
    %1052 = vmatpush1.msra.mxu0 %v341
    %1053 = vmatprep.subr.mxu0 %v345
    %1054 = vmatpush1.msra.mxu0 %v344
    %1055 = vmatprep.subr.mxu0 %v348
    %1056 = vmatpush1.msra.mxu0 %v347
    %1057 = vmatprep.subr.mxu0 %v351
    %1058 = vmatpush1.msra.mxu0 %v350
    %1059 = vmatprep.subr.mxu0 %v354
    %1060 = vmatpush1.msra.mxu0 %v353
    %1061 = vmatprep.subr.mxu0 %v357
    %1062 = vmatpush1.msra.mxu0 %v356
    %1063 = vmatprep.subr.mxu0 %v360
    %1064 = vmatpush1.msra.mxu0 %v359
    %1065 = vmatprep.subr.mxu0 %v363
    %1066 = vmatpush1.msra.mxu0 %v362
    %1067 = vmatprep.subr.mxu0 %v366
    %1068 = vmatpush1.msra.mxu0 %v365
    %1069 = vmatprep.subr.mxu0 %v369
    %1070 = vmatpush1.msra.mxu0 %v368
    %1071 = vmatprep.subr.mxu0 %v372
    %1072 = vmatpush1.msra.mxu0 %v371
    %1073 = vmatprep.subr.mxu0 %v375
    %1074 = vmatpush1.msra.mxu0 %v374
    %1075 = vmatprep.subr.mxu0 %v378
    %1076 = vmatpush1.msra.mxu0 %v377
    %1077 = vmatprep.subr.mxu0 %v381
    %1078 = vmatpush1.msra.mxu0 %v380
    %1079 = vmatprep.subr.mxu0 0.0
    %1080 = vmatpush1.msra.mxu0 0.0
    %1081 = vmatprep.subr.mxu0 0.0
    %1082 = vmatpush1.msra.mxu0 0.0
    %1083 = vmatprep.subr.mxu0 0.0
    %1084 = vmatpush1.msra.mxu0 0.0
    %1085 = vmatprep.subr.mxu0 0.0
    %1086 = vmatpush1.msra.mxu0 0.0
    %1087 = vmatprep.subr.mxu0 0.0
    %1088 = vmatpush1.msra.mxu0 0.0
    %1089 = vmatprep.subr.mxu0 0.0
    %1090 = vmatpush1.msra.mxu0 0.0
    %1091 = vmatprep.subr.mxu0 0.0
    %1092 = vmatpush1.msra.mxu0 0.0
    %1093 = vmatprep.subr.mxu0 0.0
    %1094 = vmatpush1.msra.mxu0 0.0
    %1095 = vmatprep.subr.mxu0 0.0
    %1096 = vmatpush1.msra.mxu0 0.0
    %1097 = vmatprep.subr.mxu0 0.0
    %1098 = vmatpush1.msra.mxu0 0.0
    %1099 = vmatprep.subr.mxu0 0.0
    %1100 = vmatpush1.msra.mxu0 0.0
    %1101 = vmatprep.subr.mxu0 0.0
    %1102 = vmatpush1.msra.mxu0 0.0
    %1103 = vmatprep.subr.mxu0 0.0
    %1104 = vmatpush1.msra.mxu0 0.0
    %1105 = vmatprep.subr.mxu0 0.0
    %1106 = vmatpush1.msra.mxu0 0.0
    %1107 = vmatprep.subr.mxu0 0.0
    %1108 = vmatpush1.msra.mxu0 0.0
    %1109 = vmatprep.subr.mxu0 0.0
    %1110 = vmatpush1.msra.mxu0 0.0
    %1111 = vmatprep.mubr.f32.mxu0 0.0
    %1112 = vmatmul.mubr.f32.gmra.mrb[0].mxu0 %v1045
    %v1113 = vpop.f32.mrb[0].mxu0
    %v1114 = vadd.f32 0.0, %v1113
    %v1115 = vpop.f32.mrb[0].mxu0
    %v1116 = vadd.f32 0.0, %v1115
    %1117 = vdwg.mxu0
    %1118 = vmatprep.subr.mxu0 0.0
    %1119 = vmatpush1.msra.mxu0 %v337
    %1120 = vmatprep.subr.mxu0 0.0
    %1121 = vmatpush1.msra.mxu0 %v340
    %1122 = vmatprep.subr.mxu0 0.0
    %1123 = vmatpush1.msra.mxu0 %v343
    %1124 = vmatprep.subr.mxu0 0.0
    %1125 = vmatpush1.msra.mxu0 %v346
    %1126 = vmatprep.subr.mxu0 0.0
    %1127 = vmatpush1.msra.mxu0 %v349
    %1128 = vmatprep.subr.mxu0 0.0
    %1129 = vmatpush1.msra.mxu0 %v352
    %1130 = vmatprep.subr.mxu0 0.0
    %1131 = vmatpush1.msra.mxu0 %v355
    %1132 = vmatprep.subr.mxu0 0.0
    %1133 = vmatpush1.msra.mxu0 %v358
    %1134 = vmatprep.subr.mxu0 0.0
    %1135 = vmatpush1.msra.mxu0 %v361
    %1136 = vmatprep.subr.mxu0 0.0
    %1137 = vmatpush1.msra.mxu0 %v364
    %1138 = vmatprep.subr.mxu0 0.0
    %1139 = vmatpush1.msra.mxu0 %v367
    %1140 = vmatprep.subr.mxu0 0.0
    %1141 = vmatpush1.msra.mxu0 %v370
    %1142 = vmatprep.subr.mxu0 0.0
    %1143 = vmatpush1.msra.mxu0 %v373
    %1144 = vmatprep.subr.mxu0 0.0
    %1145 = vmatpush1.msra.mxu0 %v376
    %1146 = vmatprep.subr.mxu0 0.0
    %1147 = vmatpush1.msra.mxu0 %v379
    %1148 = vmatprep.subr.mxu0 0.0
    %1149 = vmatpush1.msra.mxu0 %v382
    %1150 = vmatprep.subr.mxu0 0.0
    %1151 = vmatpush1.msra.mxu0 0.0
    %1152 = vmatprep.subr.mxu0 0.0
    %1153 = vmatpush1.msra.mxu0 0.0
    %1154 = vmatprep.subr.mxu0 0.0
    %1155 = vmatpush1.msra.mxu0 0.0
    %1156 = vmatprep.subr.mxu0 0.0
    %1157 = vmatpush1.msra.mxu0 0.0
    %1158 = vmatprep.subr.mxu0 0.0
    %1159 = vmatpush1.msra.mxu0 0.0
    %1160 = vmatprep.subr.mxu0 0.0
    %1161 = vmatpush1.msra.mxu0 0.0
    %1162 = vmatprep.subr.mxu0 0.0
    %1163 = vmatpush1.msra.mxu0 0.0
    %1164 = vmatprep.subr.mxu0 0.0
    %1165 = vmatpush1.msra.mxu0 0.0
    %1166 = vmatprep.subr.mxu0 0.0
    %1167 = vmatpush1.msra.mxu0 0.0
    %1168 = vmatprep.subr.mxu0 0.0
    %1169 = vmatpush1.msra.mxu0 0.0
    %1170 = vmatprep.subr.mxu0 0.0
    %1171 = vmatpush1.msra.mxu0 0.0
    %1172 = vmatprep.subr.mxu0 0.0
    %1173 = vmatpush1.msra.mxu0 0.0
    %1174 = vmatprep.subr.mxu0 0.0
    %1175 = vmatpush1.msra.mxu0 0.0
    %1176 = vmatprep.subr.mxu0 0.0
    %1177 = vmatpush1.msra.mxu0 0.0
    %1178 = vmatprep.subr.mxu0 0.0
    %1179 = vmatpush1.msra.mxu0 0.0
    %1180 = vmatprep.subr.mxu0 0.0
    %1181 = vmatpush1.msra.mxu0 0.0
    %1182 = vmatprep.mubr.f32.mxu0 0.0
    %1183 = vmatmul.mubr.f32.gmra.mrb[0].mxu0 %v1045
    %v1184 = vpop.f32.mrb[0].mxu0
    %v1185 = vadd.f32 0.0, %v1184
    %v1186 = vpop.f32.mrb[0].mxu0
    %1187 = vdwg.mxu0
    %v1188 = vadd.f32 %v208, %v1114
    %v1189 = vadd.f32 %v210, %v1116
    %v1190 = vxor.u32 %v1188, 2147483648
    %v1191 = vxor.u32 %v1189, 2147483648
    %v1192 = vmul.f32 %v1190, 1.442695
    %v1193 = vpow.pop %v1192
    %v1194 = vmul.f32 %v1191, 1.442695
    %v1195 = vpow.pop %v1194
    %v1196 = vadd.f32 %v1193, 1.0
    %v1197 = vadd.f32 %v1195, 1.0
    %v1198 = vrcp.pop %v1196
    %v1199 = vmul.f32 1.0, %v1198
    %v1200 = vrcp.pop %v1197
    %v1201 = vmul.f32 1.0, %v1200
    %v1202 = vadd.f32 %v1185, %v544
    %v1203 = vmul.f32 %v1199, %v1202
    %v1204 = vadd.f32 %v317, %v1203
    %v1205 = vtanh.pop %v1204
    %v1206 = vsub.f32 1.0, %v1201
    %v1207 = vmul.f32 %v1206, %v1205
    %v1208 = vmul.f32 %v1201, %v1045
    %v1209 = vadd.f32 %v1207, %v1208
    %1210 = vst [vmem:[#allocation2 + $0x20] sm:$0xff] %v1209
    %1211 = vmatprep.subr.mxu0 %v336
    %1212 = vmatpush1.msra.mxu0 %v335
    %1213 = vmatprep.subr.mxu0 %v339
    %1214 = vmatpush1.msra.mxu0 %v338
    %1215 = vmatprep.subr.mxu0 %v342
    %1216 = vmatpush1.msra.mxu0 %v341
    %1217 = vmatprep.subr.mxu0 %v345
    %1218 = vmatpush1.msra.mxu0 %v344
    %1219 = vmatprep.subr.mxu0 %v348
    %1220 = vmatpush1.msra.mxu0 %v347
    %1221 = vmatprep.subr.mxu0 %v351
    %1222 = vmatpush1.msra.mxu0 %v350
    %1223 = vmatprep.subr.mxu0 %v354
    %1224 = vmatpush1.msra.mxu0 %v353
    %1225 = vmatprep.subr.mxu0 %v357
    %1226 = vmatpush1.msra.mxu0 %v356
    %1227 = vmatprep.subr.mxu0 %v360
    %1228 = vmatpush1.msra.mxu0 %v359
    %1229 = vmatprep.subr.mxu0 %v363
    %1230 = vmatpush1.msra.mxu0 %v362
    %1231 = vmatprep.subr.mxu0 %v366
    %1232 = vmatpush1.msra.mxu0 %v365
    %1233 = vmatprep.subr.mxu0 %v369
    %1234 = vmatpush1.msra.mxu0 %v368
    %1235 = vmatprep.subr.mxu0 %v372
    %1236 = vmatpush1.msra.mxu0 %v371
    %1237 = vmatprep.subr.mxu0 %v375
    %1238 = vmatpush1.msra.mxu0 %v374
    %1239 = vmatprep.subr.mxu0 %v378
    %1240 = vmatpush1.msra.mxu0 %v377
    %1241 = vmatprep.subr.mxu0 %v381
    %1242 = vmatpush1.msra.mxu0 %v380
    %1243 = vmatprep.subr.mxu0 0.0
    %1244 = vmatpush1.msra.mxu0 0.0
    %1245 = vmatprep.subr.mxu0 0.0
    %1246 = vmatpush1.msra.mxu0 0.0
    %1247 = vmatprep.subr.mxu0 0.0
    %1248 = vmatpush1.msra.mxu0 0.0
    %1249 = vmatprep.subr.mxu0 0.0
    %1250 = vmatpush1.msra.mxu0 0.0
    %1251 = vmatprep.subr.mxu0 0.0
    %1252 = vmatpush1.msra.mxu0 0.0
    %1253 = vmatprep.subr.mxu0 0.0
    %1254 = vmatpush1.msra.mxu0 0.0
    %1255 = vmatprep.subr.mxu0 0.0
    %1256 = vmatpush1.msra.mxu0 0.0
    %1257 = vmatprep.subr.mxu0 0.0
    %1258 = vmatpush1.msra.mxu0 0.0
    %1259 = vmatprep.subr.mxu0 0.0
    %1260 = vmatpush1.msra.mxu0 0.0
    %1261 = vmatprep.subr.mxu0 0.0
    %1262 = vmatpush1.msra.mxu0 0.0
    %1263 = vmatprep.subr.mxu0 0.0
    %1264 = vmatpush1.msra.mxu0 0.0
    %1265 = vmatprep.subr.mxu0 0.0
    %1266 = vmatpush1.msra.mxu0 0.0
    %1267 = vmatprep.subr.mxu0 0.0
    %1268 = vmatpush1.msra.mxu0 0.0
    %1269 = vmatprep.subr.mxu0 0.0
    %1270 = vmatpush1.msra.mxu0 0.0
    %1271 = vmatprep.subr.mxu0 0.0
    %1272 = vmatpush1.msra.mxu0 0.0
    %1273 = vmatprep.subr.mxu0 0.0
    %1274 = vmatpush1.msra.mxu0 0.0
    %1275 = vmatprep.mubr.f32.mxu0 0.0
    %1276 = vmatmul.mubr.f32.gmra.mrb[0].mxu0 %v1209
    %v1277 = vpop.f32.mrb[0].mxu0
    %v1278 = vadd.f32 0.0, %v1277
    %v1279 = vpop.f32.mrb[0].mxu0
    %v1280 = vadd.f32 0.0, %v1279
    %1281 = vdwg.mxu0
    %1282 = vmatprep.subr.mxu0 0.0
    %1283 = vmatpush1.msra.mxu0 %v337
    %1284 = vmatprep.subr.mxu0 0.0
    %1285 = vmatpush1.msra.mxu0 %v340
    %1286 = vmatprep.subr.mxu0 0.0
    %1287 = vmatpush1.msra.mxu0 %v343
    %1288 = vmatprep.subr.mxu0 0.0
    %1289 = vmatpush1.msra.mxu0 %v346
    %1290 = vmatprep.subr.mxu0 0.0
    %1291 = vmatpush1.msra.mxu0 %v349
    %1292 = vmatprep.subr.mxu0 0.0
    %1293 = vmatpush1.msra.mxu0 %v352
    %1294 = vmatprep.subr.mxu0 0.0
    %1295 = vmatpush1.msra.mxu0 %v355
    %1296 = vmatprep.subr.mxu0 0.0
    %1297 = vmatpush1.msra.mxu0 %v358
    %1298 = vmatprep.subr.mxu0 0.0
    %1299 = vmatpush1.msra.mxu0 %v361
    %1300 = vmatprep.subr.mxu0 0.0
    %1301 = vmatpush1.msra.mxu0 %v364
    %1302 = vmatprep.subr.mxu0 0.0
    %1303 = vmatpush1.msra.mxu0 %v367
    %1304 = vmatprep.subr.mxu0 0.0
    %1305 = vmatpush1.msra.mxu0 %v370
    %1306 = vmatprep.subr.mxu0 0.0
    %1307 = vmatpush1.msra.mxu0 %v373
    %1308 = vmatprep.subr.mxu0 0.0
    %1309 = vmatpush1.msra.mxu0 %v376
    %1310 = vmatprep.subr.mxu0 0.0
    %1311 = vmatpush1.msra.mxu0 %v379
    %1312 = vmatprep.subr.mxu0 0.0
    %1313 = vmatpush1.msra.mxu0 %v382
    %1314 = vmatprep.subr.mxu0 0.0
    %1315 = vmatpush1.msra.mxu0 0.0
    %1316 = vmatprep.subr.mxu0 0.0
    %1317 = vmatpush1.msra.mxu0 0.0
    %1318 = vmatprep.subr.mxu0 0.0
    %1319 = vmatpush1.msra.mxu0 0.0
    %1320 = vmatprep.subr.mxu0 0.0
    %1321 = vmatpush1.msra.mxu0 0.0
    %1322 = vmatprep.subr.mxu0 0.0
    %1323 = vmatpush1.msra.mxu0 0.0
    %1324 = vmatprep.subr.mxu0 0.0
    %1325 = vmatpush1.msra.mxu0 0.0
    %1326 = vmatprep.subr.mxu0 0.0
    %1327 = vmatpush1.msra.mxu0 0.0
    %1328 = vmatprep.subr.mxu0 0.0
    %1329 = vmatpush1.msra.mxu0 0.0
    %1330 = vmatprep.subr.mxu0 0.0
    %1331 = vmatpush1.msra.mxu0 0.0
    %1332 = vmatprep.subr.mxu0 0.0
    %1333 = vmatpush1.msra.mxu0 0.0
    %1334 = vmatprep.subr.mxu0 0.0
    %1335 = vmatpush1.msra.mxu0 0.0
    %1336 = vmatprep.subr.mxu0 0.0
    %1337 = vmatpush1.msra.mxu0 0.0
    %1338 = vmatprep.subr.mxu0 0.0
    %1339 = vmatpush1.msra.mxu0 0.0
    %1340 = vmatprep.subr.mxu0 0.0
    %1341 = vmatpush1.msra.mxu0 0.0
    %1342 = vmatprep.subr.mxu0 0.0
    %1343 = vmatpush1.msra.mxu0 0.0
    %1344 = vmatprep.subr.mxu0 0.0
    %1345 = vmatpush1.msra.mxu0 0.0
    %1346 = vmatprep.mubr.f32.mxu0 0.0
    %1347 = vmatmul.mubr.f32.gmra.mrb[0].mxu0 %v1209
    %v1348 = vpop.f32.mrb[0].mxu0
    %v1349 = vadd.f32 0.0, %v1348
    %v1350 = vpop.f32.mrb[0].mxu0
    %1351 = vdwg.mxu0
    %v1352 = vadd.f32 %v214, %v1278
    %v1353 = vadd.f32 %v216, %v1280
    %v1354 = vxor.u32 %v1352, 2147483648
    %v1355 = vxor.u32 %v1353, 2147483648
    %v1356 = vmul.f32 %v1354, 1.442695
    %v1357 = vpow.pop %v1356
    %v1358 = vmul.f32 %v1355, 1.442695
    %v1359 = vpow.pop %v1358
    %v1360 = vadd.f32 %v1357, 1.0
    %v1361 = vadd.f32 %v1359, 1.0
    %v1362 = vrcp.pop %v1360
    %v1363 = vmul.f32 1.0, %v1362
    %v1364 = vrcp.pop %v1361
    %v1365 = vmul.f32 1.0, %v1364
    %v1366 = vadd.f32 %v1349, %v544
    %v1367 = vmul.f32 %v1363, %v1366
    %v1368 = vadd.f32 %v322, %v1367
    %v1369 = vtanh.pop %v1368
    %v1370 = vsub.f32 1.0, %v1365
    %v1371 = vmul.f32 %v1370, %v1369
    %v1372 = vmul.f32 %v1365, %v1209
    %v1373 = vadd.f32 %v1371, %v1372
    %1374 = vst [vmem:[#allocation2 + $0x28] sm:$0xff] %v1373
    %1375 = vmatprep.subr.mxu0 %v336
    %1376 = vmatpush1.msra.mxu0 %v335
    %1377 = vmatprep.subr.mxu0 %v339
    %1378 = vmatpush1.msra.mxu0 %v338
    %1379 = vmatprep.subr.mxu0 %v342
    %1380 = vmatpush1.msra.mxu0 %v341
    %1381 = vmatprep.subr.mxu0 %v345
    %1382 = vmatpush1.msra.mxu0 %v344
    %1383 = vmatprep.subr.mxu0 %v348
    %1384 = vmatpush1.msra.mxu0 %v347
    %1385 = vmatprep.subr.mxu0 %v351
    %1386 = vmatpush1.msra.mxu0 %v350
    %1387 = vmatprep.subr.mxu0 %v354
    %1388 = vmatpush1.msra.mxu0 %v353
    %1389 = vmatprep.subr.mxu0 %v357
    %1390 = vmatpush1.msra.mxu0 %v356
    %1391 = vmatprep.subr.mxu0 %v360
    %1392 = vmatpush1.msra.mxu0 %v359
    %1393 = vmatprep.subr.mxu0 %v363
    %1394 = vmatpush1.msra.mxu0 %v362
    %1395 = vmatprep.subr.mxu0 %v366
    %1396 = vmatpush1.msra.mxu0 %v365
    %1397 = vmatprep.subr.mxu0 %v369
    %1398 = vmatpush1.msra.mxu0 %v368
    %1399 = vmatprep.subr.mxu0 %v372
    %1400 = vmatpush1.msra.mxu0 %v371
    %1401 = vmatprep.subr.mxu0 %v375
    %1402 = vmatpush1.msra.mxu0 %v374
    %1403 = vmatprep.subr.mxu0 %v378
    %1404 = vmatpush1.msra.mxu0 %v377
    %1405 = vmatprep.subr.mxu0 %v381
    %1406 = vmatpush1.msra.mxu0 %v380
    %1407 = vmatprep.subr.mxu0 0.0
    %1408 = vmatpush1.msra.mxu0 0.0
    %1409 = vmatprep.subr.mxu0 0.0
    %1410 = vmatpush1.msra.mxu0 0.0
    %1411 = vmatprep.subr.mxu0 0.0
    %1412 = vmatpush1.msra.mxu0 0.0
    %1413 = vmatprep.subr.mxu0 0.0
    %1414 = vmatpush1.msra.mxu0 0.0
    %1415 = vmatprep.subr.mxu0 0.0
    %1416 = vmatpush1.msra.mxu0 0.0
    %1417 = vmatprep.subr.mxu0 0.0
    %1418 = vmatpush1.msra.mxu0 0.0
    %1419 = vmatprep.subr.mxu0 0.0
    %1420 = vmatpush1.msra.mxu0 0.0
    %1421 = vmatprep.subr.mxu0 0.0
    %1422 = vmatpush1.msra.mxu0 0.0
    %1423 = vmatprep.subr.mxu0 0.0
    %1424 = vmatpush1.msra.mxu0 0.0
    %1425 = vmatprep.subr.mxu0 0.0
    %1426 = vmatpush1.msra.mxu0 0.0
    %1427 = vmatprep.subr.mxu0 0.0
    %1428 = vmatpush1.msra.mxu0 0.0
    %1429 = vmatprep.subr.mxu0 0.0
    %1430 = vmatpush1.msra.mxu0 0.0
    %1431 = vmatprep.subr.mxu0 0.0
    %1432 = vmatpush1.msra.mxu0 0.0
    %1433 = vmatprep.subr.mxu0 0.0
    %1434 = vmatpush1.msra.mxu0 0.0
    %1435 = vmatprep.subr.mxu0 0.0
    %1436 = vmatpush1.msra.mxu0 0.0
    %1437 = vmatprep.subr.mxu0 0.0
    %1438 = vmatpush1.msra.mxu0 0.0
    %1439 = vmatprep.mubr.f32.mxu0 0.0
    %1440 = vmatmul.mubr.f32.gmra.mrb[0].mxu0 %v1373
    %v1441 = vpop.f32.mrb[0].mxu0
    %v1442 = vadd.f32 0.0, %v1441
    %v1443 = vpop.f32.mrb[0].mxu0
    %v1444 = vadd.f32 0.0, %v1443
    %1445 = vdwg.mxu0
    %1446 = vmatprep.subr.mxu0 0.0
    %1447 = vmatpush1.msra.mxu0 %v337
    %1448 = vmatprep.subr.mxu0 0.0
    %1449 = vmatpush1.msra.mxu0 %v340
    %1450 = vmatprep.subr.mxu0 0.0
    %1451 = vmatpush1.msra.mxu0 %v343
    %1452 = vmatprep.subr.mxu0 0.0
    %1453 = vmatpush1.msra.mxu0 %v346
    %1454 = vmatprep.subr.mxu0 0.0
    %1455 = vmatpush1.msra.mxu0 %v349
    %1456 = vmatprep.subr.mxu0 0.0
    %1457 = vmatpush1.msra.mxu0 %v352
    %1458 = vmatprep.subr.mxu0 0.0
    %1459 = vmatpush1.msra.mxu0 %v355
    %1460 = vmatprep.subr.mxu0 0.0
    %1461 = vmatpush1.msra.mxu0 %v358
    %1462 = vmatprep.subr.mxu0 0.0
    %1463 = vmatpush1.msra.mxu0 %v361
    %1464 = vmatprep.subr.mxu0 0.0
    %1465 = vmatpush1.msra.mxu0 %v364
    %1466 = vmatprep.subr.mxu0 0.0
    %1467 = vmatpush1.msra.mxu0 %v367
    %1468 = vmatprep.subr.mxu0 0.0
    %1469 = vmatpush1.msra.mxu0 %v370
    %1470 = vmatprep.subr.mxu0 0.0
    %1471 = vmatpush1.msra.mxu0 %v373
    %1472 = vmatprep.subr.mxu0 0.0
    %1473 = vmatpush1.msra.mxu0 %v376
    %1474 = vmatprep.subr.mxu0 0.0
    %1475 = vmatpush1.msra.mxu0 %v379
    %1476 = vmatprep.subr.mxu0 0.0
    %1477 = vmatpush1.msra.mxu0 %v382
    %1478 = vmatprep.subr.mxu0 0.0
    %1479 = vmatpush1.msra.mxu0 0.0
    %1480 = vmatprep.subr.mxu0 0.0
    %1481 = vmatpush1.msra.mxu0 0.0
    %1482 = vmatprep.subr.mxu0 0.0
    %1483 = vmatpush1.msra.mxu0 0.0
    %1484 = vmatprep.subr.mxu0 0.0
    %1485 = vmatpush1.msra.mxu0 0.0
    %1486 = vmatprep.subr.mxu0 0.0
    %1487 = vmatpush1.msra.mxu0 0.0
    %1488 = vmatprep.subr.mxu0 0.0
    %1489 = vmatpush1.msra.mxu0 0.0
    %1490 = vmatprep.subr.mxu0 0.0
    %1491 = vmatpush1.msra.mxu0 0.0
    %1492 = vmatprep.subr.mxu0 0.0
    %1493 = vmatpush1.msra.mxu0 0.0
    %1494 = vmatprep.subr.mxu0 0.0
    %1495 = vmatpush1.msra.mxu0 0.0
    %1496 = vmatprep.subr.mxu0 0.0
    %1497 = vmatpush1.msra.mxu0 0.0
    %1498 = vmatprep.subr.mxu0 0.0
    %1499 = vmatpush1.msra.mxu0 0.0
    %1500 = vmatprep.subr.mxu0 0.0
    %1501 = vmatpush1.msra.mxu0 0.0
    %1502 = vmatprep.subr.mxu0 0.0
    %1503 = vmatpush1.msra.mxu0 0.0
    %1504 = vmatprep.subr.mxu0 0.0
    %1505 = vmatpush1.msra.mxu0 0.0
    %1506 = vmatprep.subr.mxu0 0.0
    %1507 = vmatpush1.msra.mxu0 0.0
    %1508 = vmatprep.subr.mxu0 0.0
    %1509 = vmatpush1.msra.mxu0 0.0
    %1510 = vmatprep.mubr.f32.mxu0 0.0
    %1511 = vmatmul.mubr.f32.gmra.mrb[0].mxu0 %v1373
    %v1512 = vpop.f32.mrb[0].mxu0
    %v1513 = vadd.f32 0.0, %v1512
    %v1514 = vpop.f32.mrb[0].mxu0
    %1515 = vdwg.mxu0
    %v1516 = vadd.f32 %v220, %v1442
    %v1517 = vadd.f32 %v222, %v1444
    %v1518 = vxor.u32 %v1516, 2147483648
    %v1519 = vxor.u32 %v1517, 2147483648
    %v1520 = vmul.f32 %v1518, 1.442695
    %v1521 = vpow.pop %v1520
    %v1522 = vmul.f32 %v1519, 1.442695
    %v1523 = vpow.pop %v1522
    %v1524 = vadd.f32 %v1521, 1.0
    %v1525 = vadd.f32 %v1523, 1.0
    %v1526 = vrcp.pop %v1524
    %v1527 = vmul.f32 1.0, %v1526
    %v1528 = vrcp.pop %v1525
    %v1529 = vmul.f32 1.0, %v1528
    %v1530 = vadd.f32 %v1513, %v544
    %v1531 = vmul.f32 %v1527, %v1530
    %v1532 = vadd.f32 %v327, %v1531
    %v1533 = vtanh.pop %v1532
    %v1534 = vsub.f32 1.0, %v1529
    %v1535 = vmul.f32 %v1534, %v1533
    %v1536 = vmul.f32 %v1529, %v1373
    %v1537 = vadd.f32 %v1535, %v1536
    %1538 = vst [vmem:[#allocation2 + $0x30] sm:$0xff] %v1537
    %1539 = vmatprep.subr.mxu0 %v336
    %1540 = vmatpush1.msra.mxu0 %v335
    %1541 = vmatprep.subr.mxu0 %v339
    %1542 = vmatpush1.msra.mxu0 %v338
    %1543 = vmatprep.subr.mxu0 %v342
    %1544 = vmatpush1.msra.mxu0 %v341
    %1545 = vmatprep.subr.mxu0 %v345
    %1546 = vmatpush1.msra.mxu0 %v344
    %1547 = vmatprep.subr.mxu0 %v348
    %1548 = vmatpush1.msra.mxu0 %v347
    %1549 = vmatprep.subr.mxu0 %v351
    %1550 = vmatpush1.msra.mxu0 %v350
    %1551 = vmatprep.subr.mxu0 %v354
    %1552 = vmatpush1.msra.mxu0 %v353
    %1553 = vmatprep.subr.mxu0 %v357
    %1554 = vmatpush1.msra.mxu0 %v356
    %1555 = vmatprep.subr.mxu0 %v360
    %1556 = vmatpush1.msra.mxu0 %v359
    %1557 = vmatprep.subr.mxu0 %v363
    %1558 = vmatpush1.msra.mxu0 %v362
    %1559 = vmatprep.subr.mxu0 %v366
    %1560 = vmatpush1.msra.mxu0 %v365
    %1561 = vmatprep.subr.mxu0 %v369
    %1562 = vmatpush1.msra.mxu0 %v368
    %1563 = vmatprep.subr.mxu0 %v372
    %1564 = vmatpush1.msra.mxu0 %v371
    %1565 = vmatprep.subr.mxu0 %v375
    %1566 = vmatpush1.msra.mxu0 %v374
    %1567 = vmatprep.subr.mxu0 %v378
    %1568 = vmatpush1.msra.mxu0 %v377
    %1569 = vmatprep.subr.mxu0 %v381
    %1570 = vmatpush1.msra.mxu0 %v380
    %1571 = vmatprep.subr.mxu0 0.0
    %1572 = vmatpush1.msra.mxu0 0.0
    %1573 = vmatprep.subr.mxu0 0.0
    %1574 = vmatpush1.msra.mxu0 0.0
    %1575 = vmatprep.subr.mxu0 0.0
    %1576 = vmatpush1.msra.mxu0 0.0
    %1577 = vmatprep.subr.mxu0 0.0
    %1578 = vmatpush1.msra.mxu0 0.0
    %1579 = vmatprep.subr.mxu0 0.0
    %1580 = vmatpush1.msra.mxu0 0.0
    %1581 = vmatprep.subr.mxu0 0.0
    %1582 = vmatpush1.msra.mxu0 0.0
    %1583 = vmatprep.subr.mxu0 0.0
    %1584 = vmatpush1.msra.mxu0 0.0
    %1585 = vmatprep.subr.mxu0 0.0
    %1586 = vmatpush1.msra.mxu0 0.0
    %1587 = vmatprep.subr.mxu0 0.0
    %1588 = vmatpush1.msra.mxu0 0.0
    %1589 = vmatprep.subr.mxu0 0.0
    %1590 = vmatpush1.msra.mxu0 0.0
    %1591 = vmatprep.subr.mxu0 0.0
    %1592 = vmatpush1.msra.mxu0 0.0
    %1593 = vmatprep.subr.mxu0 0.0
    %1594 = vmatpush1.msra.mxu0 0.0
    %1595 = vmatprep.subr.mxu0 0.0
    %1596 = vmatpush1.msra.mxu0 0.0
    %1597 = vmatprep.subr.mxu0 0.0
    %1598 = vmatpush1.msra.mxu0 0.0
    %1599 = vmatprep.subr.mxu0 0.0
    %1600 = vmatpush1.msra.mxu0 0.0
    %1601 = vmatprep.subr.mxu0 0.0
    %1602 = vmatpush1.msra.mxu0 0.0
    %1603 = vmatprep.mubr.f32.mxu0 0.0
    %1604 = vmatmul.mubr.f32.gmra.mrb[0].mxu0 %v1537
    %v1605 = vpop.f32.mrb[0].mxu0
    %v1606 = vadd.f32 0.0, %v1605
    %v1607 = vpop.f32.mrb[0].mxu0
    %v1608 = vadd.f32 0.0, %v1607
    %1609 = vdwg.mxu0
    %1610 = vmatprep.subr.mxu0 0.0
    %1611 = vmatpush1.msra.mxu0 %v337
    %1612 = vmatprep.subr.mxu0 0.0
    %1613 = vmatpush1.msra.mxu0 %v340
    %1614 = vmatprep.subr.mxu0 0.0
    %1615 = vmatpush1.msra.mxu0 %v343
    %1616 = vmatprep.subr.mxu0 0.0
    %1617 = vmatpush1.msra.mxu0 %v346
    %1618 = vmatprep.subr.mxu0 0.0
    %1619 = vmatpush1.msra.mxu0 %v349
    %1620 = vmatprep.subr.mxu0 0.0
    %1621 = vmatpush1.msra.mxu0 %v352
    %1622 = vmatprep.subr.mxu0 0.0
    %1623 = vmatpush1.msra.mxu0 %v355
    %1624 = vmatprep.subr.mxu0 0.0
    %1625 = vmatpush1.msra.mxu0 %v358
    %1626 = vmatprep.subr.mxu0 0.0
    %1627 = vmatpush1.msra.mxu0 %v361
    %1628 = vmatprep.subr.mxu0 0.0
    %1629 = vmatpush1.msra.mxu0 %v364
    %1630 = vmatprep.subr.mxu0 0.0
    %1631 = vmatpush1.msra.mxu0 %v367
    %1632 = vmatprep.subr.mxu0 0.0
    %1633 = vmatpush1.msra.mxu0 %v370
    %1634 = vmatprep.subr.mxu0 0.0
    %1635 = vmatpush1.msra.mxu0 %v373
    %1636 = vmatprep.subr.mxu0 0.0
    %1637 = vmatpush1.msra.mxu0 %v376
    %1638 = vmatprep.subr.mxu0 0.0
    %1639 = vmatpush1.msra.mxu0 %v379
    %1640 = vmatprep.subr.mxu0 0.0
    %1641 = vmatpush1.msra.mxu0 %v382
    %1642 = vmatprep.subr.mxu0 0.0
    %1643 = vmatpush1.msra.mxu0 0.0
    %1644 = vmatprep.subr.mxu0 0.0
    %1645 = vmatpush1.msra.mxu0 0.0
    %1646 = vmatprep.subr.mxu0 0.0
    %1647 = vmatpush1.msra.mxu0 0.0
    %1648 = vmatprep.subr.mxu0 0.0
    %1649 = vmatpush1.msra.mxu0 0.0
    %1650 = vmatprep.subr.mxu0 0.0
    %1651 = vmatpush1.msra.mxu0 0.0
    %1652 = vmatprep.subr.mxu0 0.0
    %1653 = vmatpush1.msra.mxu0 0.0
    %1654 = vmatprep.subr.mxu0 0.0
    %1655 = vmatpush1.msra.mxu0 0.0
    %1656 = vmatprep.subr.mxu0 0.0
    %1657 = vmatpush1.msra.mxu0 0.0
    %1658 = vmatprep.subr.mxu0 0.0
    %1659 = vmatpush1.msra.mxu0 0.0
    %1660 = vmatprep.subr.mxu0 0.0
    %1661 = vmatpush1.msra.mxu0 0.0
    %1662 = vmatprep.subr.mxu0 0.0
    %1663 = vmatpush1.msra.mxu0 0.0
    %1664 = vmatprep.subr.mxu0 0.0
    %1665 = vmatpush1.msra.mxu0 0.0
    %1666 = vmatprep.subr.mxu0 0.0
    %1667 = vmatpush1.msra.mxu0 0.0
    %1668 = vmatprep.subr.mxu0 0.0
    %1669 = vmatpush1.msra.mxu0 0.0
    %1670 = vmatprep.subr.mxu0 0.0
    %1671 = vmatpush1.msra.mxu0 0.0
    %1672 = vmatprep.subr.mxu0 0.0
    %1673 = vmatpush1.msra.mxu0 0.0
    %1674 = vmatprep.mubr.f32.mxu0 0.0
    %1675 = vmatmul.mubr.f32.gmra.mrb[0].mxu0 %v1537
    %v1676 = vpop.f32.mrb[0].mxu0
    %v1677 = vadd.f32 0.0, %v1676
    %v1678 = vpop.f32.mrb[0].mxu0
    %1679 = vdwg.mxu0
    %v1680 = vadd.f32 %v226, %v1606
    %v1681 = vadd.f32 %v228, %v1608
    %v1682 = vxor.u32 %v1680, 2147483648
    %v1683 = vxor.u32 %v1681, 2147483648
    %v1684 = vmul.f32 %v1682, 1.442695
    %v1685 = vpow.pop %v1684
    %v1686 = vmul.f32 %v1683, 1.442695
    %v1687 = vpow.pop %v1686
    %v1688 = vadd.f32 %v1685, 1.0
    %v1689 = vadd.f32 %v1687, 1.0
    %v1690 = vrcp.pop %v1688
    %v1691 = vmul.f32 1.0, %v1690
    %v1692 = vrcp.pop %v1689
    %v1693 = vmul.f32 1.0, %v1692
    %v1694 = vadd.f32 %v1677, %v544
    %v1695 = vmul.f32 %v1691, %v1694
    %v1696 = vadd.f32 %v332, %v1695
    %v1697 = vtanh.pop %v1696
    %v1698 = vsub.f32 1.0, %v1693
    %v1699 = vmul.f32 %v1698, %v1697
    %v1700 = vmul.f32 %v1693, %v1537
    %v1701 = vadd.f32 %v1699, %v1700
    %1702 = vst [vmem:[#allocation2 + $0x38] sm:$0xff] %v1701
    %1703 = vst [vmem:[#allocation9] sm:$0xff] %v1701
    %v1704 = vld [vmem:[#allocation2] sm:$0xff]
    %v1705 = vld [vmem:[#allocation2 + $0x8] sm:$0xff]
    %v1706 = vld [vmem:[#allocation2 + $0x10] sm:$0xff]
    %v1707 = vld [vmem:[#allocation2 + $0x18] sm:$0xff]
    %v1708 = vld [vmem:[#allocation2 + $0x20] sm:$0xff]
    %v1709 = vld [vmem:[#allocation2 + $0x28] sm:$0xff]
    %v1710 = vld [vmem:[#allocation2 + $0x30] sm:$0xff]
    %v1711 = vld [vmem:[#allocation2 + $0x38] sm:$0xff]
    %v1712 = vld [vmem:[#allocation6] sm:$0xff]
    %v1713 = vld [vmem:[#allocation6 + $0x8] sm:$0xff]
    %v1714 = vld [vmem:[#allocation6 + $0x10] sm:$0xff]
    %v1715 = vld [vmem:[#allocation6 + $0x18] sm:$0xff]
    %v1716 = vld [vmem:[#allocation6 + $0x20] sm:$0xff]
    %v1717 = vld [vmem:[#allocation6 + $0x28] sm:$0xff]
    %v1718 = vld [vmem:[#allocation6 + $0x30] sm:$0xff]
    %v1719 = vld [vmem:[#allocation6 + $0x38] sm:$0xff]
    %v1720 = vld [vmem:[#allocation6 + $0x40] sm:$0xff]
    %v1721 = vld [vmem:[#allocation6 + $0x48] sm:$0xff]
    %v1722 = vld [vmem:[#allocation6 + $0x50] sm:$0xff]
    %v1723 = vld [vmem:[#allocation6 + $0x58] sm:$0xff]
    %v1724 = vld [vmem:[#allocation6 + $0x60] sm:$0xff]
    %v1725 = vld [vmem:[#allocation6 + $0x68] sm:$0xff]
    %v1726 = vld [vmem:[#allocation6 + $0x70] sm:$0xff]
    %v1727 = vld [vmem:[#allocation6 + $0x78] sm:$0xff]
    %v1728 = vld [vmem:[%s7] sm:$0x1]
    %v1730 = vlaneseq
    %v1731 = vshrl.u32 %v1730, 7
    %v1732 = vsub.s32 0, %v1731
    %v1733 = vrot.slane %v1728, %v1732
    %1735 = vmatprep.subr.mxu0 0.0
    %1736 = vmatpush1.msra.mxu0 %v1712
    %1737 = vmatprep.subr.mxu0 0.0
    %1738 = vmatpush1.msra.mxu0 %v1713
    %1739 = vmatprep.subr.mxu0 0.0
    %1740 = vmatpush1.msra.mxu0 %v1714
    %1741 = vmatprep.subr.mxu0 0.0
    %1742 = vmatpush1.msra.mxu0 %v1715
    %1743 = vmatprep.subr.mxu0 0.0
    %1744 = vmatpush1.msra.mxu0 %v1716
    %1745 = vmatprep.subr.mxu0 0.0
    %1746 = vmatpush1.msra.mxu0 %v1717
    %1747 = vmatprep.subr.mxu0 0.0
    %1748 = vmatpush1.msra.mxu0 %v1718
    %1749 = vmatprep.subr.mxu0 0.0
    %1750 = vmatpush1.msra.mxu0 %v1719
    %1751 = vmatprep.subr.mxu0 0.0
    %1752 = vmatpush1.msra.mxu0 %v1720
    %1753 = vmatprep.subr.mxu0 0.0
    %1754 = vmatpush1.msra.mxu0 %v1721
    %1755 = vmatprep.subr.mxu0 0.0
    %1756 = vmatpush1.msra.mxu0 %v1722
    %1757 = vmatprep.subr.mxu0 0.0
    %1758 = vmatpush1.msra.mxu0 %v1723
    %1759 = vmatprep.subr.mxu0 0.0
    %1760 = vmatpush1.msra.mxu0 %v1724
    %1761 = vmatprep.subr.mxu0 0.0
    %1762 = vmatpush1.msra.mxu0 %v1725
    %1763 = vmatprep.subr.mxu0 0.0
    %1764 = vmatpush1.msra.mxu0 %v1726
    %1765 = vmatprep.subr.mxu0 0.0
    %1766 = vmatpush1.msra.mxu0 %v1727
    %1767 = vmatprep.subr.mxu0 0.0
    %1768 = vmatpush1.msra.mxu0 0.0
    %1769 = vmatprep.subr.mxu0 0.0
    %1770 = vmatpush1.msra.mxu0 0.0
    %1771 = vmatprep.subr.mxu0 0.0
    %1772 = vmatpush1.msra.mxu0 0.0
    %1773 = vmatprep.subr.mxu0 0.0
    %1774 = vmatpush1.msra.mxu0 0.0
    %1775 = vmatprep.subr.mxu0 0.0
    %1776 = vmatpush1.msra.mxu0 0.0
    %1777 = vmatprep.subr.mxu0 0.0
    %1778 = vmatpush1.msra.mxu0 0.0
    %1779 = vmatprep.subr.mxu0 0.0
    %1780 = vmatpush1.msra.mxu0 0.0
    %1781 = vmatprep.subr.mxu0 0.0
    %1782 = vmatpush1.msra.mxu0 0.0
    %1783 = vmatprep.subr.mxu0 0.0
    %1784 = vmatpush1.msra.mxu0 0.0
    %1785 = vmatprep.subr.mxu0 0.0
    %1786 = vmatpush1.msra.mxu0 0.0
    %1787 = vmatprep.subr.mxu0 0.0
    %1788 = vmatpush1.msra.mxu0 0.0
    %1789 = vmatprep.subr.mxu0 0.0
    %1790 = vmatpush1.msra.mxu0 0.0
    %1791 = vmatprep.subr.mxu0 0.0
    %1792 = vmatpush1.msra.mxu0 0.0
    %1793 = vmatprep.subr.mxu0 0.0
    %1794 = vmatpush1.msra.mxu0 0.0
    %1795 = vmatprep.subr.mxu0 0.0
    %1796 = vmatpush1.msra.mxu0 0.0
    %1797 = vmatprep.subr.mxu0 0.0
    %1798 = vmatpush1.msra.mxu0 0.0
    %1799 = vmatprep.mubr.f32.mxu0 0.0
    %1800 = vmatmul.mubr.f32.gmra.mrb[0].mxu0 %v1704
    %v1801 = vpop.f32.mrb[0].mxu0
    %v1802 = vadd.f32 %v1733, %v1801
    %v1803 = vpop.f32.mrb[0].mxu0
    %1804 = vmatprep.mubr.f32.mxu0 0.0
    %1805 = vmatmul.mubr.f32.gmra.mrb[0].mxu0 %v1705
    %v1806 = vpop.f32.mrb[0].mxu0
    %v1807 = vadd.f32 %v1733, %v1806
    %v1808 = vpop.f32.mrb[0].mxu0
    %1809 = vmatprep.mubr.f32.mxu0 0.0
    %1810 = vmatmul.mubr.f32.gmra.mrb[0].mxu0 %v1706
    %v1811 = vpop.f32.mrb[0].mxu0
    %v1812 = vadd.f32 %v1733, %v1811
    %v1813 = vpop.f32.mrb[0].mxu0
    %1814 = vmatprep.mubr.f32.mxu0 0.0
    %1815 = vmatmul.mubr.f32.gmra.mrb[0].mxu0 %v1707
    %v1816 = vpop.f32.mrb[0].mxu0
    %v1817 = vadd.f32 %v1733, %v1816
    %v1818 = vpop.f32.mrb[0].mxu0
    %1819 = vmatprep.mubr.f32.mxu0 0.0
    %1820 = vmatmul.mubr.f32.gmra.mrb[0].mxu0 %v1708
    %v1821 = vpop.f32.mrb[0].mxu0
    %v1822 = vadd.f32 %v1733, %v1821
    %v1823 = vpop.f32.mrb[0].mxu0
    %1824 = vmatprep.mubr.f32.mxu0 0.0
    %1825 = vmatmul.mubr.f32.gmra.mrb[0].mxu0 %v1709
    %v1826 = vpop.f32.mrb[0].mxu0
    %v1827 = vadd.f32 %v1733, %v1826
    %v1828 = vpop.f32.mrb[0].mxu0
    %1829 = vmatprep.mubr.f32.mxu0 0.0
    %1830 = vmatmul.mubr.f32.gmra.mrb[0].mxu0 %v1710
    %v1831 = vpop.f32.mrb[0].mxu0
    %v1832 = vadd.f32 %v1733, %v1831
    %v1833 = vpop.f32.mrb[0].mxu0
    %1834 = vmatprep.mubr.f32.mxu0 0.0
    %1835 = vmatmul.mubr.f32.gmra.mrb[0].mxu0 %v1711
    %v1836 = vpop.f32.mrb[0].mxu0
    %v1837 = vadd.f32 %v1733, %v1836
    %v1838 = vpop.f32.mrb[0].mxu0
    %1839 = vdwg.mxu0
    %1840 = vst [vmem:[#allocation8] sm:$0xff] %v1802
    %1841 = vst [vmem:[#allocation8 + $0x8] sm:$0xff] %v1807
    %1842 = vst [vmem:[#allocation8 + $0x10] sm:$0xff] %v1812
    %1843 = vst [vmem:[#allocation8 + $0x18] sm:$0xff] %v1817
    %1844 = vst [vmem:[#allocation8 + $0x20] sm:$0xff] %v1822
    %1845 = vst [vmem:[#allocation8 + $0x28] sm:$0xff] %v1827
    %1846 = vst [vmem:[#allocation8 + $0x30] sm:$0xff] %v1832
    %1847 = vst [vmem:[#allocation8 + $0x38] sm:$0xff] %v1837
    // Predicated region
    $region42: #{tpu_custom_call.1} parent=1 // pred_check
      _
    $region43: #{tpu_custom_call.1} parent=1 // pred_check_branch
      %1849 = sbr.rel (0) target = $region45
    $region44: #{tpu_custom_call.1} parent=1 // pred_region
      %s1851 = ssub.s32 1024, 1024
      %1852 = vsyncadd [#allocation5], %s1851
      %s1853 = sshll.u32 [#allocation8], 4
      %s1854 = int_to_ptr.vmem [resolvable:$true] %s1853
      %1859 = dma.vmem_to_hbm [thread:$0]  %s1854, 1024, %s8, [#allocation5], 128, 128, 8
    $region45: #{tpu_custom_call.1} parent=1 // pred_fallthru
      _
    // Predicated region
    $region46: #{tpu_custom_call.1} parent=1 // pred_check
      _
    $region47: #{tpu_custom_call.1} parent=1 // pred_check_branch
      %1861 = sbr.rel (0) target = $region49
    $region48: #{tpu_custom_call.1} parent=1 // pred_region
      %s1863 = ssub.s32 128, 128
      %1864 = vsyncadd [#allocation10], %s1863
      %s1866 = sshll.u32 [#allocation9], 4
      %s1867 = int_to_ptr.vmem [resolvable:$true] %s1866
      %1869 = dma.vmem_to_hbm [thread:$0]  %s1867, 128, %s9, [#allocation10]
    $region49: #{tpu_custom_call.1} parent=1 // pred_fallthru
      _
    // Predicated region
    $region50: #{tpu_custom_call.1} parent=1 // pred_check
      _
    $region51: #{tpu_custom_call.1} parent=1 // pred_check_branch
      %1871 = sbr.rel (0) target = $region53
    $region52: #{tpu_custom_call.1} parent=1 // pred_region
      %1872 = dma.done [#allocation5], 1024
    $region53: #{tpu_custom_call.1} parent=1 // pred_fallthru
      _
    // Predicated region
    $region54: #{tpu_custom_call.1} parent=1 // pred_check
      _
    $region55: #{tpu_custom_call.1} parent=1 // pred_check_branch
      %1874 = sbr.rel (0) target = $region57
    $region56: #{tpu_custom_call.1} parent=1 // pred_region
      %1875 = dma.done [#allocation10], 128
    $region57: #{tpu_custom_call.1} parent=1 // pred_fallthru
      _
    %1876 = vsyncpa [#allocation4], 1
    %1877 = vsyncpa [#allocation7], 1
    %1878 = vsyncpa [#allocation5], 1
    %1879 = vsyncpa [#allocation10], 1

</llo_original>
